<compile_context>
chip_gen: v5e
topology: v5e:2x2
jax: 0.10.0
libtpu: 0.0.40
codegen_flags: <defaults>
</compile_context>

<pallas_src>
import numpy as np
import jax
import jax.numpy as jnp
from jax.experimental import pallas as pl
from jax.experimental.pallas import tpu as pltpu

# ---------------- configuration (small, consistent with the module) ----------------
T = 8                # sequence length
B = 2                # batch size
D = 64               # input_dim of the CRF head (e.g. BiLSTM output 2*32)
V = 100              # word vocab size (only used to build `words` / the pad mask)
WORD_PAD_IDX = 0
TAG_NAMES = ['<pad>', 'O', 'B-PER', 'I-PER', 'B-LOC', 'I-LOC']
K = len(TAG_NAMES)   # 6 real tags
KP = 8               # tag dim padded to the f32 sublane count
NEG = -1.0e9         # score for padded tags (never selected, exp() underflows to 0)


# ======================= fused Pallas kernel =======================

def crf_fused_kernel(feats_ref, mask_ref, tags_ref,
                     fc_w_ref, fc_b_ref, trans_ref, start_ref, end_ref,
                     hist_ref, final_ref, nll_ref):
    """Fused FC + CRF forward (logsumexp) + Viterbi (max/argmax) + gold-path score.

    feats_ref : (T*B, D)  f32   word features, sequence-major rows (t*B + b)
    mask_ref  : (T*B, 1)  f32   1.0 where words != pad
    tags_ref  : (T*B, 1)  i32   gold tags
    fc_w_ref  : (D, KP)   f32   fc weight (pad cols zero)
    fc_b_ref  : (1, KP)   f32   fc bias   (pad cols NEG)
    trans_ref : (KP, KP)  f32   CRF transitions (pad rows/cols NEG)
    start_ref : (1, KP)   f32   CRF start transitions (pad NEG)
    end_ref   : (1, KP)   f32   CRF end transitions   (pad NEG)
    hist_ref  : (T, B, KP) i32  Viterbi backpointers (out)
    final_ref : (B, KP)   f32   last Viterbi alpha + end (out)
    nll_ref   : (B, 1)    f32   per-batch negative log-likelihood (out)
    """
    Tn, Bb, Kp = hist_ref.shape

    # ---- FC projection fused in: emissions (T*B, KP) stay in VMEM ----
    em2 = (jnp.dot(feats_ref[...], fc_w_ref[...],
                   preferred_element_type=jnp.float32) + fc_b_ref[...])

    trans = trans_ref[...]
    start = start_ref[...]
    end = end_ref[...]
    maskf = mask_ref[...]

    # one-hot of gold tags + transition rows trans[tags[t], :], one matmul for all timesteps
    oh = (jax.lax.broadcasted_iota(jnp.int32, (Tn * Bb, Kp), 1)
          == tags_ref[...]).astype(jnp.float32)                         # (T*B, KP)
    rows = jnp.dot(oh, trans, preferred_element_type=jnp.float32)       # (T*B, KP)

    def blk(x, t):  # rows of timestep t (t is a static Python int)
        return x[t * Bb:(t + 1) * Bb]

    zero_b1 = jnp.zeros((Bb, 1), jnp.float32)
    last_oh = jnp.zeros((Bb, Kp), jnp.float32)   # one-hot of the gold tag at each sequence end

    alpha_v = None   # Viterbi (max) alpha
    alpha_p = None   # forward (logsumexp) alpha
    num = None       # gold path score accumulator

    # Static T -> the recurrence is fully unrolled at trace time (no grid-step overhead).
    for t in range(Tn):
        em_t = blk(em2, t)                       # (B, KP)
        oh_t = blk(oh, t)                        # (B, KP)
        m_t = blk(maskf, t)                      # (B, 1)
        m_next = blk(maskf, t + 1) if t + 1 < Tn else zero_b1
        last_oh = last_oh + oh_t * m_t * (1.0 - m_next)

        if t == 0:
            alpha_v = start + em_t
            alpha_p = alpha_v
            hist_ref[0] = jnp.zeros((Bb, Kp), jnp.int32)
            num = (jnp.sum(oh_t * start, axis=1, keepdims=True)
                   + jnp.sum(oh_t * em_t, axis=1, keepdims=True))        # (B, 1)
        else:
            # shared (B, KP, KP) piece of the score tensor for both DPs
            base = trans[None, :, :] + em_t[:, None, :]

            # Viterbi max / first-argmax
            score_v = alpha_v[:, :, None] + base
            best = jnp.max(score_v, axis=1)                              # (B, KP)
            idx = jax.lax.broadcasted_iota(jnp.int32, score_v.shape, 1)
            arg = jnp.min(jnp.where(score_v >= best[:, None, :], idx, Kp), axis=1)
            hist_ref[t] = arg                                            # stays in VMEM until writeback
            alpha_v = jnp.where(m_t > 0, best, alpha_v)

            # forward algorithm (log-partition)
            score_p = alpha_p[:, :, None] + base
            mx = jnp.max(score_p, axis=1, keepdims=True)                 # (B, 1, KP)
            lse = jnp.log(jnp.sum(jnp.exp(score_p - mx), axis=1)) + mx[:, 0, :]
            alpha_p = jnp.where(m_t > 0, lse, alpha_p)

            # gold path increment: mask * (trans[tag_{t-1}, tag_t] + em[t, tag_t])
            tr_t = jnp.sum(blk(rows, t - 1) * oh_t, axis=1, keepdims=True)
            em_sel = jnp.sum(oh_t * em_t, axis=1, keepdims=True)
            num = num + m_t * (tr_t + em_sel)

    final_ref[...] = alpha_v + end

    fin_p = alpha_p + end
    mz = jnp.max(fin_p, axis=1, keepdims=True)
    log_z = jnp.log(jnp.sum(jnp.exp(fin_p - mz), axis=1, keepdims=True)) + mz    # (B, 1)
    end_sel = jnp.sum(last_oh * end, axis=1, keepdims=True)                      # (B, 1)
    nll_ref[...] = log_z - (num + end_sel)


def run_crf_fused(feats2, maskf, tags2, fc_w, fc_b, trans, start, end, Tt, Bb):
    return pl.pallas_call(
        crf_fused_kernel,
        out_shape=(jax.ShapeDtypeStruct((Tt, Bb, KP), jnp.int32),   # backpointers
                   jax.ShapeDtypeStruct((Bb, KP), jnp.float32),     # final Viterbi scores
                   jax.ShapeDtypeStruct((Bb, 1), jnp.float32)),     # per-batch NLL
        in_specs=[pl.BlockSpec(memory_space=pltpu.MemorySpace.VMEM)] * 8,
        out_specs=(pl.BlockSpec(memory_space=pltpu.MemorySpace.VMEM),) * 3,
    )(feats2, maskf, tags2, fc_w, fc_b, trans, start, end)


# ======================= plain-JAX glue =======================

def crf_backtrace(hist, mask, best_last):
    """Viterbi backtrace. Padded positions are filled with 0 (torchcrf returns ragged lists)."""
    Tt, Bb, _ = hist.shape
    bidx = jnp.arange(Bb)
    mask_b = mask > 0.5
    mask_next = jnp.concatenate([mask_b[1:], jnp.zeros((1, Bb), bool)], axis=0)

    def step(carry, t):
        c = carry
        valid = mask_b[t]
        is_last = valid & jnp.logical_not(mask_next[t])
        hist_t = hist[jnp.minimum(t + 1, Tt - 1)]
        gathered = hist_t[bidx, c]
        out_t = jnp.where(is_last, best_last, jnp.where(valid, gathered, 0))
        new_c = jnp.where(valid, out_t, c)
        return new_c, out_t

    _, outs = jax.lax.scan(step, best_last.astype(jnp.int32),
                           jnp.arange(Tt - 1, -1, -1))
    return outs[::-1]                                   # (T, B)


def crf_forward(params, words, word_features, tags=None):
    """Mirrors CRF.forward(words, word_features, tags) -> (crf_out, crf_loss)."""
    Tt, Bb, Dd = word_features.shape
    mask = (words != WORD_PAD_IDX).astype(jnp.float32)              # (T, B)

    # free row-major flattens (layout plumbing only)
    feats2 = word_features.reshape(Tt * Bb, Dd)
    maskf = mask.reshape(Tt * Bb, 1)
    tags_in = tags if tags is not None else jnp.zeros_like(words)
    tags2 = tags_in.reshape(Tt * Bb, 1)

    hist, final, nll = run_crf_fused(
        feats2, maskf, tags2,
        params['fc_w'], params['fc_b'],
        params['crf_trans'], params['crf_start'], params['crf_end'],
        Tt, Bb)

    # Viterbi decode: argmax over real tags + ragged backtrace (data-dependent gather) in JAX
    best_last = jnp.argmax(final[:, :K], axis=1).astype(jnp.int32)
    crf_out = crf_backtrace(hist, mask, best_last)                  # (T, B) int32, 0 past seq end

    crf_loss = jnp.sum(nll) if tags is not None else None
    return crf_out, crf_loss


# ======================= parameter init =======================

def init_crf_transitions(tag_names, start, end, trans, imp_value=-100.0):
    start, end, trans = np.array(start), np.array(end), np.array(trans)
    for i, name in enumerate(tag_names):
        if name[0] in ('I', 'L') or name == '<pad>':
            start[i] = imp_value
        if name[0] in ('B', 'I'):
            end[i] = imp_value
    tag_is = {p: [i for i, tag in enumerate(tag_names) if tag[0] == p]
              for p in ('B', 'I', 'O', 'U', 'L')}
    tag_is['P'] = [i for i, tag in enumerate(tag_names) if tag == 'tag']
    imp_pos = {'B': 'BOUP', 'I': 'BOUP', 'O': 'IL', 'U': 'IL'}
    for f, to_list in imp_pos.items():
        for fi in tag_is[f]:
            for tpos in list(to_list):
                for ti in tag_is[tpos]:
                    trans[fi, ti] = imp_value
    imp_tags = {'B': 'IL', 'I': 'IL'}
    for f, to_list in imp_tags.items():
        for fi in tag_is[f]:
            for tpos in list(to_list):
                for ti in tag_is[tpos]:
                    try:
                        if tag_names[fi].split('-')[1] != tag_names[ti].split('-')[1]:
                            trans[fi, ti] = imp_value
                    except Exception:
                        continue
    return start, end, trans


def init_params(key):
    k1, k2, k3, k4, k5 = jax.random.split(key, 5)
    s = 1.0 / np.sqrt(D)
    fc_w = jax.random.uniform(k1, (D, K), jnp.float32, -s, s)
    fc_b = jax.random.uniform(k2, (K,), jnp.float32, -s, s)

    start = jax.random.uniform(k3, (K,), jnp.float32, -0.1, 0.1)
    end = jax.random.uniform(k4, (K,), jnp.float32, -0.1, 0.1)
    trans = jax.random.uniform(k5, (K, K), jnp.float32, -0.1, 0.1)
    start, end, trans = init_crf_transitions(TAG_NAMES, start, end, trans)

    # pad the tag dimension K -> KP with NEG so padded tags never win and contribute ~0 to logsumexp
    p = {}
    p['fc_w'] = jnp.zeros((D, KP), jnp.float32).at[:, :K].set(fc_w)
    p['fc_b'] = jnp.full((1, KP), NEG, jnp.float32).at[0, :K].set(fc_b)
    p['crf_start'] = jnp.full((1, KP), NEG, jnp.float32).at[0, :K].set(
        jnp.asarray(start, jnp.float32))
    p['crf_end'] = jnp.full((1, KP), NEG, jnp.float32).at[0, :K].set(
        jnp.asarray(end, jnp.float32))
    p['crf_trans'] = jnp.full((KP, KP), NEG, jnp.float32).at[:K, :K].set(
        jnp.asarray(trans, jnp.float32))
    return p


# ======================= main =======================

if __name__ == "__main__":
    params = init_params(jax.random.PRNGKey(0))

    kw, kt, kf = jax.random.split(jax.random.PRNGKey(0), 3)
    words = jax.random.randint(kw, (T, B), 1, V, dtype=jnp.int32)
    words = words.at[6:, 1].set(WORD_PAD_IDX)   # pad tail of batch element 1 (mask[0] stays all-valid)
    word_features = jax.random.normal(kf, (T, B, D), jnp.float32)
    tags = jax.random.randint(kt, (T, B), 0, K, dtype=jnp.int32)

    fwd = jax.jit(lambda w, f, t: crf_forward(params, w, f, t))
    crf_out, crf_loss = fwd(words, word_features, tags)
    jax.block_until_ready((crf_out, crf_loss))
    print("KERNEL_OK")
</pallas_src>

<mosaic_0001>
module attributes {stable_mosaic.version = 11 : i64} {
  func.func @crf_fused_kernel(%arg0: memref<16x64xf32, #tpu.memory_space<vmem>>, %arg1: memref<16x1xf32, #tpu.memory_space<vmem>>, %arg2: memref<16x1xi32, #tpu.memory_space<vmem>>, %arg3: memref<64x8xf32, #tpu.memory_space<vmem>>, %arg4: memref<1x8xf32, #tpu.memory_space<vmem>>, %arg5: memref<8x8xf32, #tpu.memory_space<vmem>>, %arg6: memref<1x8xf32, #tpu.memory_space<vmem>>, %arg7: memref<1x8xf32, #tpu.memory_space<vmem>>, %arg8: memref<8x2x8xi32, #tpu.memory_space<vmem>>, %arg9: memref<2x8xf32, #tpu.memory_space<vmem>>, %arg10: memref<2x1xf32, #tpu.memory_space<vmem>>) attributes {dimension_semantics = [], scalar_prefetch = 0 : i64, scratch_operands = 0 : i64, tpu.core_type = #tpu.core_type<tc>} {
    %c0 = arith.constant 0 : index
    %c0_0 = arith.constant 0 : index
    %0 = vector.load %arg0[%c0, %c0_0] : memref<16x64xf32, #tpu.memory_space<vmem>>, vector<16x64xf32>
    %c0_1 = arith.constant 0 : index
    %c0_2 = arith.constant 0 : index
    %1 = vector.load %arg3[%c0_1, %c0_2] : memref<64x8xf32, #tpu.memory_space<vmem>>, vector<64x8xf32>
    %cst = arith.constant dense<0.000000e+00> : vector<16x8xf32>
    %2 = tpu.matmul %0, %1, %cst {dimension_numbers = #tpu.dot_dimension_numbers<[1], [0], [0], [1], [0, 0, 1, 1], [], []>} : vector<16x64xf32>, vector<64x8xf32>, vector<16x8xf32> -> vector<16x8xf32>
    %c0_3 = arith.constant 0 : index
    %c0_4 = arith.constant 0 : index
    %3 = vector.load %arg4[%c0_3, %c0_4] : memref<1x8xf32, #tpu.memory_space<vmem>>, vector<1x8xf32>
    %4 = vector.broadcast %3 : vector<1x8xf32> to vector<16x8xf32>
    %5 = arith.addf %2, %4 : vector<16x8xf32>
    %c0_5 = arith.constant 0 : index
    %c0_6 = arith.constant 0 : index
    %6 = vector.load %arg5[%c0_5, %c0_6] : memref<8x8xf32, #tpu.memory_space<vmem>>, vector<8x8xf32>
    %c0_7 = arith.constant 0 : index
    %c0_8 = arith.constant 0 : index
    %7 = vector.load %arg6[%c0_7, %c0_8] : memref<1x8xf32, #tpu.memory_space<vmem>>, vector<1x8xf32>
    %c0_9 = arith.constant 0 : index
    %c0_10 = arith.constant 0 : index
    %8 = vector.load %arg7[%c0_9, %c0_10] : memref<1x8xf32, #tpu.memory_space<vmem>>, vector<1x8xf32>
    %c0_11 = arith.constant 0 : index
    %c0_12 = arith.constant 0 : index
    %9 = vector.load %arg1[%c0_11, %c0_12] : memref<16x1xf32, #tpu.memory_space<vmem>>, vector<16x1xf32>
    %10 = tpu.iota {dimensions = array<i32: 1>} : vector<16x8xi32>
    %c0_13 = arith.constant 0 : index
    %c0_14 = arith.constant 0 : index
    %11 = vector.load %arg2[%c0_13, %c0_14] : memref<16x1xi32, #tpu.memory_space<vmem>>, vector<16x1xi32>
    %12 = vector.broadcast %11 : vector<16x1xi32> to vector<16x8xi32>
    %13 = arith.cmpi eq, %10, %12 : vector<16x8xi32>
    %14 = arith.extui %13 : vector<16x8xi1> to vector<16x8xi32>
    %15 = arith.sitofp %14 : vector<16x8xi32> to vector<16x8xf32>
    %cst_15 = arith.constant dense<0.000000e+00> : vector<16x8xf32>
    %16 = tpu.matmul %15, %6, %cst_15 {dimension_numbers = #tpu.dot_dimension_numbers<[1], [0], [0], [1], [0, 0, 1, 1], [], []>} : vector<16x8xf32>, vector<8x8xf32>, vector<16x8xf32> -> vector<16x8xf32>
    %cst_16 = arith.constant 0.000000e+00 : f32
    %17 = vector.broadcast %cst_16 : f32 to vector<2x1xf32>
    %cst_17 = arith.constant 0.000000e+00 : f32
    %18 = vector.broadcast %cst_17 : f32 to vector<2x8xf32>
    %19 = vector.extract_strided_slice %5 {offsets = [0, 0], sizes = [2, 8], strides = [1, 1]} : vector<16x8xf32> to vector<2x8xf32>
    %20 = vector.extract_strided_slice %15 {offsets = [0, 0], sizes = [2, 8], strides = [1, 1]} : vector<16x8xf32> to vector<2x8xf32>
    %21 = vector.extract_strided_slice %9 {offsets = [0, 0], sizes = [2, 1], strides = [1, 1]} : vector<16x1xf32> to vector<2x1xf32>
    %22 = vector.extract_strided_slice %9 {offsets = [2, 0], sizes = [2, 1], strides = [1, 1]} : vector<16x1xf32> to vector<2x1xf32>
    %23 = vector.broadcast %21 : vector<2x1xf32> to vector<2x8xf32>
    %24 = arith.mulf %20, %23 : vector<2x8xf32>
    %cst_18 = arith.constant 1.000000e+00 : f32
    %25 = vector.broadcast %cst_18 : f32 to vector<2x1xf32>
    %26 = arith.subf %25, %22 : vector<2x1xf32>
    %27 = vector.broadcast %26 : vector<2x1xf32> to vector<2x8xf32>
    %28 = arith.mulf %24, %27 : vector<2x8xf32>
    %29 = arith.addf %18, %28 : vector<2x8xf32>
    %30 = vector.broadcast %7 : vector<1x8xf32> to vector<2x8xf32>
    %31 = arith.addf %30, %19 : vector<2x8xf32>
    %c0_i32 = arith.constant 0 : i32
    %32 = vector.broadcast %c0_i32 : i32 to vector<2x8xi32>
    %c0_19 = arith.constant 0 : index
    %c0_20 = arith.constant 0 : index
    %c0_21 = arith.constant 0 : index
    %33 = vector.load %arg8[%c0_19, %c0_20, %c0_21] : memref<8x2x8xi32, #tpu.memory_space<vmem>>, vector<1x2x8xi32>
    %34 = vector.shape_cast %33 : vector<1x2x8xi32> to vector<2x8xi32>
    %35 = vector.shape_cast %32 : vector<2x8xi32> to vector<1x2x8xi32>
    tpu.vector_store %arg8[%c0_19, %c0_20, %c0_21], %35 {strides = array<i32>} : memref<8x2x8xi32, #tpu.memory_space<vmem>>, vector<1x2x8xi32>,
    %36 = vector.broadcast %7 : vector<1x8xf32> to vector<2x8xf32>
    %37 = arith.mulf %20, %36 : vector<2x8xf32>
    %cst_22 = arith.constant dense<0.000000e+00> : vector<2xf32>
    %38 = vector.multi_reduction <add>, %37, %cst_22 [1] : vector<2x8xf32> to vector<2xf32>
    %39 = vector.shape_cast %38 : vector<2xf32> to vector<2x1xf32>
    %40 = arith.mulf %20, %19 : vector<2x8xf32>
    %cst_23 = arith.constant dense<0.000000e+00> : vector<2xf32>
    %41 = vector.multi_reduction <add>, %40, %cst_23 [1] : vector<2x8xf32> to vector<2xf32>
    %42 = vector.shape_cast %41 : vector<2xf32> to vector<2x1xf32>
    %43 = arith.addf %39, %42 : vector<2x1xf32>
    %44 = vector.extract_strided_slice %5 {offsets = [2, 0], sizes = [2, 8], strides = [1, 1]} : vector<16x8xf32> to vector<2x8xf32>
    %45 = vector.extract_strided_slice %15 {offsets = [2, 0], sizes = [2, 8], strides = [1, 1]} : vector<16x8xf32> to vector<2x8xf32>
    %46 = vector.extract_strided_slice %9 {offsets = [2, 0], sizes = [2, 1], strides = [1, 1]} : vector<16x1xf32> to vector<2x1xf32>
    %47 = vector.extract_strided_slice %9 {offsets = [4, 0], sizes = [2, 1], strides = [1, 1]} : vector<16x1xf32> to vector<2x1xf32>
    %48 = vector.broadcast %46 : vector<2x1xf32> to vector<2x8xf32>
    %49 = arith.mulf %45, %48 : vector<2x8xf32>
    %cst_24 = arith.constant 1.000000e+00 : f32
    %50 = vector.broadcast %cst_24 : f32 to vector<2x1xf32>
    %51 = arith.subf %50, %47 : vector<2x1xf32>
    %52 = vector.broadcast %51 : vector<2x1xf32> to vector<2x8xf32>
    %53 = arith.mulf %49, %52 : vector<2x8xf32>
    %54 = arith.addf %29, %53 : vector<2x8xf32>
    %55 = vector.shape_cast %6 : vector<8x8xf32> to vector<1x8x8xf32>
    %56 = vector.shape_cast %44 : vector<2x8xf32> to vector<2x1x8xf32>
    %57 = vector.broadcast %55 : vector<1x8x8xf32> to vector<2x8x8xf32>
    %58 = vector.broadcast %56 : vector<2x1x8xf32> to vector<2x8x8xf32>
    %59 = arith.addf %57, %58 : vector<2x8x8xf32>
    %60 = vector.shape_cast %31 : vector<2x8xf32> to vector<2x8x1xf32>
    %61 = vector.broadcast %60 : vector<2x8x1xf32> to vector<2x8x8xf32>
    %62 = arith.addf %61, %59 : vector<2x8x8xf32>
    %cst_25 = arith.constant dense<0xFF800000> : vector<2x8xf32>
    %63 = vector.multi_reduction <maximumf>, %62, %cst_25 [1] : vector<2x8x8xf32> to vector<2x8xf32>
    %64 = tpu.iota {dimensions = array<i32: 1>} : vector<2x8x8xi32>
    %65 = vector.shape_cast %63 : vector<2x8xf32> to vector<2x1x8xf32>
    %66 = vector.broadcast %65 : vector<2x1x8xf32> to vector<2x8x8xf32>
    %67 = arith.cmpf oge, %62, %66 : vector<2x8x8xf32>
    %c8_i32 = arith.constant 8 : i32
    %68 = vector.broadcast %c8_i32 : i32 to vector<2x8x8xi32>
    %69 = arith.select %67, %64, %68 : vector<2x8x8xi1>, vector<2x8x8xi32>
    %cst_26 = arith.constant dense<2147483647> : vector<2x8xi32>
    %70 = vector.multi_reduction <minsi>, %69, %cst_26 [1] : vector<2x8x8xi32> to vector<2x8xi32>
    %c1 = arith.constant 1 : index
    %c0_27 = arith.constant 0 : index
    %c0_28 = arith.constant 0 : index
    %71 = vector.load %arg8[%c1, %c0_27, %c0_28] : memref<8x2x8xi32, #tpu.memory_space<vmem>>, vector<1x2x8xi32>
    %72 = vector.shape_cast %71 : vector<1x2x8xi32> to vector<2x8xi32>
    %73 = vector.shape_cast %70 : vector<2x8xi32> to vector<1x2x8xi32>
    tpu.vector_store %arg8[%c1, %c0_27, %c0_28], %73 {strides = array<i32>} : memref<8x2x8xi32, #tpu.memory_space<vmem>>, vector<1x2x8xi32>,
    %cst_29 = arith.constant 0.000000e+00 : f32
    %74 = vector.broadcast %cst_29 : f32 to vector<2x1xf32>
    %75 = arith.cmpf ogt, %46, %74 : vector<2x1xf32>
    %76 = vector.shape_cast %75 : vector<2x1xi1> to vector<2x1xi1>
    %77 = vector.broadcast %76 : vector<2x1xi1> to vector<2x8xi1>
    %78 = arith.select %77, %63, %31 : vector<2x8xi1>, vector<2x8xf32>
    %79 = vector.shape_cast %31 : vector<2x8xf32> to vector<2x8x1xf32>
    %80 = vector.broadcast %79 : vector<2x8x1xf32> to vector<2x8x8xf32>
    %81 = arith.addf %80, %59 : vector<2x8x8xf32>
    %cst_30 = arith.constant dense<0xFF800000> : vector<2x8xf32>
    %82 = vector.multi_reduction <maximumf>, %81, %cst_30 [1] : vector<2x8x8xf32> to vector<2x8xf32>
    %83 = vector.shape_cast %82 : vector<2x8xf32> to vector<2x1x8xf32>
    %84 = vector.broadcast %83 : vector<2x1x8xf32> to vector<2x8x8xf32>
    %85 = arith.subf %81, %84 : vector<2x8x8xf32>
    %86 = math.exp %85 : vector<2x8x8xf32>
    %cst_31 = arith.constant dense<0.000000e+00> : vector<2x8xf32>
    %87 = vector.multi_reduction <add>, %86, %cst_31 [1] : vector<2x8x8xf32> to vector<2x8xf32>
    %88 = math.log %87 : vector<2x8xf32>
    %89 = vector.shape_cast %83 : vector<2x1x8xf32> to vector<2x8xf32>
    %90 = arith.addf %88, %89 : vector<2x8xf32>
    %cst_32 = arith.constant 0.000000e+00 : f32
    %91 = vector.broadcast %cst_32 : f32 to vector<2x1xf32>
    %92 = arith.cmpf ogt, %46, %91 : vector<2x1xf32>
    %93 = vector.shape_cast %92 : vector<2x1xi1> to vector<2x1xi1>
    %94 = vector.broadcast %93 : vector<2x1xi1> to vector<2x8xi1>
    %95 = arith.select %94, %90, %31 : vector<2x8xi1>, vector<2x8xf32>
    %96 = vector.extract_strided_slice %16 {offsets = [0, 0], sizes = [2, 8], strides = [1, 1]} : vector<16x8xf32> to vector<2x8xf32>
    %97 = arith.mulf %96, %45 : vector<2x8xf32>
    %cst_33 = arith.constant dense<0.000000e+00> : vector<2xf32>
    %98 = vector.multi_reduction <add>, %97, %cst_33 [1] : vector<2x8xf32> to vector<2xf32>
    %99 = vector.shape_cast %98 : vector<2xf32> to vector<2x1xf32>
    %100 = arith.mulf %45, %44 : vector<2x8xf32>
    %cst_34 = arith.constant dense<0.000000e+00> : vector<2xf32>
    %101 = vector.multi_reduction <add>, %100, %cst_34 [1] : vector<2x8xf32> to vector<2xf32>
    %102 = vector.shape_cast %101 : vector<2xf32> to vector<2x1xf32>
    %103 = arith.addf %99, %102 : vector<2x1xf32>
    %104 = arith.mulf %46, %103 : vector<2x1xf32>
    %105 = arith.addf %43, %104 : vector<2x1xf32>
    %106 = vector.extract_strided_slice %5 {offsets = [4, 0], sizes = [2, 8], strides = [1, 1]} : vector<16x8xf32> to vector<2x8xf32>
    %107 = vector.extract_strided_slice %15 {offsets = [4, 0], sizes = [2, 8], strides = [1, 1]} : vector<16x8xf32> to vector<2x8xf32>
    %108 = vector.extract_strided_slice %9 {offsets = [4, 0], sizes = [2, 1], strides = [1, 1]} : vector<16x1xf32> to vector<2x1xf32>
    %109 = vector.extract_strided_slice %9 {offsets = [6, 0], sizes = [2, 1], strides = [1, 1]} : vector<16x1xf32> to vector<2x1xf32>
    %110 = vector.broadcast %108 : vector<2x1xf32> to vector<2x8xf32>
    %111 = arith.mulf %107, %110 : vector<2x8xf32>
    %cst_35 = arith.constant 1.000000e+00 : f32
    %112 = vector.broadcast %cst_35 : f32 to vector<2x1xf32>
    %113 = arith.subf %112, %109 : vector<2x1xf32>
    %114 = vector.broadcast %113 : vector<2x1xf32> to vector<2x8xf32>
    %115 = arith.mulf %111, %114 : vector<2x8xf32>
    %116 = arith.addf %54, %115 : vector<2x8xf32>
    %117 = vector.shape_cast %6 : vector<8x8xf32> to vector<1x8x8xf32>
    %118 = vector.shape_cast %106 : vector<2x8xf32> to vector<2x1x8xf32>
    %119 = vector.broadcast %117 : vector<1x8x8xf32> to vector<2x8x8xf32>
    %120 = vector.broadcast %118 : vector<2x1x8xf32> to vector<2x8x8xf32>
    %121 = arith.addf %119, %120 : vector<2x8x8xf32>
    %122 = vector.shape_cast %78 : vector<2x8xf32> to vector<2x8x1xf32>
    %123 = vector.broadcast %122 : vector<2x8x1xf32> to vector<2x8x8xf32>
    %124 = arith.addf %123, %121 : vector<2x8x8xf32>
    %cst_36 = arith.constant dense<0xFF800000> : vector<2x8xf32>
    %125 = vector.multi_reduction <maximumf>, %124, %cst_36 [1] : vector<2x8x8xf32> to vector<2x8xf32>
    %126 = tpu.iota {dimensions = array<i32: 1>} : vector<2x8x8xi32>
    %127 = vector.shape_cast %125 : vector<2x8xf32> to vector<2x1x8xf32>
    %128 = vector.broadcast %127 : vector<2x1x8xf32> to vector<2x8x8xf32>
    %129 = arith.cmpf oge, %124, %128 : vector<2x8x8xf32>
    %c8_i32_37 = arith.constant 8 : i32
    %130 = vector.broadcast %c8_i32_37 : i32 to vector<2x8x8xi32>
    %131 = arith.select %129, %126, %130 : vector<2x8x8xi1>, vector<2x8x8xi32>
    %cst_38 = arith.constant dense<2147483647> : vector<2x8xi32>
    %132 = vector.multi_reduction <minsi>, %131, %cst_38 [1] : vector<2x8x8xi32> to vector<2x8xi32>
    %c2 = arith.constant 2 : index
    %c0_39 = arith.constant 0 : index
    %c0_40 = arith.constant 0 : index
    %133 = vector.load %arg8[%c2, %c0_39, %c0_40] : memref<8x2x8xi32, #tpu.memory_space<vmem>>, vector<1x2x8xi32>
    %134 = vector.shape_cast %133 : vector<1x2x8xi32> to vector<2x8xi32>
    %135 = vector.shape_cast %132 : vector<2x8xi32> to vector<1x2x8xi32>
    tpu.vector_store %arg8[%c2, %c0_39, %c0_40], %135 {strides = array<i32>} : memref<8x2x8xi32, #tpu.memory_space<vmem>>, vector<1x2x8xi32>,
    %cst_41 = arith.constant 0.000000e+00 : f32
    %136 = vector.broadcast %cst_41 : f32 to vector<2x1xf32>
    %137 = arith.cmpf ogt, %108, %136 : vector<2x1xf32>
    %138 = vector.shape_cast %137 : vector<2x1xi1> to vector<2x1xi1>
    %139 = vector.broadcast %138 : vector<2x1xi1> to vector<2x8xi1>
    %140 = arith.select %139, %125, %78 : vector<2x8xi1>, vector<2x8xf32>
    %141 = vector.shape_cast %95 : vector<2x8xf32> to vector<2x8x1xf32>
    %142 = vector.broadcast %141 : vector<2x8x1xf32> to vector<2x8x8xf32>
    %143 = arith.addf %142, %121 : vector<2x8x8xf32>
    %cst_42 = arith.constant dense<0xFF800000> : vector<2x8xf32>
    %144 = vector.multi_reduction <maximumf>, %143, %cst_42 [1] : vector<2x8x8xf32> to vector<2x8xf32>
    %145 = vector.shape_cast %144 : vector<2x8xf32> to vector<2x1x8xf32>
    %146 = vector.broadcast %145 : vector<2x1x8xf32> to vector<2x8x8xf32>
    %147 = arith.subf %143, %146 : vector<2x8x8xf32>
    %148 = math.exp %147 : vector<2x8x8xf32>
    %cst_43 = arith.constant dense<0.000000e+00> : vector<2x8xf32>
    %149 = vector.multi_reduction <add>, %148, %cst_43 [1] : vector<2x8x8xf32> to vector<2x8xf32>
    %150 = math.log %149 : vector<2x8xf32>
    %151 = vector.shape_cast %145 : vector<2x1x8xf32> to vector<2x8xf32>
    %152 = arith.addf %150, %151 : vector<2x8xf32>
    %cst_44 = arith.constant 0.000000e+00 : f32
    %153 = vector.broadcast %cst_44 : f32 to vector<2x1xf32>
    %154 = arith.cmpf ogt, %108, %153 : vector<2x1xf32>
    %155 = vector.shape_cast %154 : vector<2x1xi1> to vector<2x1xi1>
    %156 = vector.broadcast %155 : vector<2x1xi1> to vector<2x8xi1>
    %157 = arith.select %156, %152, %95 : vector<2x8xi1>, vector<2x8xf32>
    %158 = vector.extract_strided_slice %16 {offsets = [2, 0], sizes = [2, 8], strides = [1, 1]} : vector<16x8xf32> to vector<2x8xf32>
    %159 = arith.mulf %158, %107 : vector<2x8xf32>
    %cst_45 = arith.constant dense<0.000000e+00> : vector<2xf32>
    %160 = vector.multi_reduction <add>, %159, %cst_45 [1] : vector<2x8xf32> to vector<2xf32>
    %161 = vector.shape_cast %160 : vector<2xf32> to vector<2x1xf32>
    %162 = arith.mulf %107, %106 : vector<2x8xf32>
    %cst_46 = arith.constant dense<0.000000e+00> : vector<2xf32>
    %163 = vector.multi_reduction <add>, %162, %cst_46 [1] : vector<2x8xf32> to vector<2xf32>
    %164 = vector.shape_cast %163 : vector<2xf32> to vector<2x1xf32>
    %165 = arith.addf %161, %164 : vector<2x1xf32>
    %166 = arith.mulf %108, %165 : vector<2x1xf32>
    %167 = arith.addf %105, %166 : vector<2x1xf32>
    %168 = vector.extract_strided_slice %5 {offsets = [6, 0], sizes = [2, 8], strides = [1, 1]} : vector<16x8xf32> to vector<2x8xf32>
    %169 = vector.extract_strided_slice %15 {offsets = [6, 0], sizes = [2, 8], strides = [1, 1]} : vector<16x8xf32> to vector<2x8xf32>
    %170 = vector.extract_strided_slice %9 {offsets = [6, 0], sizes = [2, 1], strides = [1, 1]} : vector<16x1xf32> to vector<2x1xf32>
    %171 = vector.extract_strided_slice %9 {offsets = [8, 0], sizes = [2, 1], strides = [1, 1]} : vector<16x1xf32> to vector<2x1xf32>
    %172 = vector.broadcast %170 : vector<2x1xf32> to vector<2x8xf32>
    %173 = arith.mulf %169, %172 : vector<2x8xf32>
    %cst_47 = arith.constant 1.000000e+00 : f32
    %174 = vector.broadcast %cst_47 : f32 to vector<2x1xf32>
    %175 = arith.subf %174, %171 : vector<2x1xf32>
    %176 = vector.broadcast %175 : vector<2x1xf32> to vector<2x8xf32>
    %177 = arith.mulf %173, %176 : vector<2x8xf32>
    %178 = arith.addf %116, %177 : vector<2x8xf32>
    %179 = vector.shape_cast %6 : vector<8x8xf32> to vector<1x8x8xf32>
    %180 = vector.shape_cast %168 : vector<2x8xf32> to vector<2x1x8xf32>
    %181 = vector.broadcast %179 : vector<1x8x8xf32> to vector<2x8x8xf32>
    %182 = vector.broadcast %180 : vector<2x1x8xf32> to vector<2x8x8xf32>
    %183 = arith.addf %181, %182 : vector<2x8x8xf32>
    %184 = vector.shape_cast %140 : vector<2x8xf32> to vector<2x8x1xf32>
    %185 = vector.broadcast %184 : vector<2x8x1xf32> to vector<2x8x8xf32>
    %186 = arith.addf %185, %183 : vector<2x8x8xf32>
    %cst_48 = arith.constant dense<0xFF800000> : vector<2x8xf32>
    %187 = vector.multi_reduction <maximumf>, %186, %cst_48 [1] : vector<2x8x8xf32> to vector<2x8xf32>
    %188 = tpu.iota {dimensions = array<i32: 1>} : vector<2x8x8xi32>
    %189 = vector.shape_cast %187 : vector<2x8xf32> to vector<2x1x8xf32>
    %190 = vector.broadcast %189 : vector<2x1x8xf32> to vector<2x8x8xf32>
    %191 = arith.cmpf oge, %186, %190 : vector<2x8x8xf32>
    %c8_i32_49 = arith.constant 8 : i32
    %192 = vector.broadcast %c8_i32_49 : i32 to vector<2x8x8xi32>
    %193 = arith.select %191, %188, %192 : vector<2x8x8xi1>, vector<2x8x8xi32>
    %cst_50 = arith.constant dense<2147483647> : vector<2x8xi32>
    %194 = vector.multi_reduction <minsi>, %193, %cst_50 [1] : vector<2x8x8xi32> to vector<2x8xi32>
    %c3 = arith.constant 3 : index
    %c0_51 = arith.constant 0 : index
    %c0_52 = arith.constant 0 : index
    %195 = vector.load %arg8[%c3, %c0_51, %c0_52] : memref<8x2x8xi32, #tpu.memory_space<vmem>>, vector<1x2x8xi32>
    %196 = vector.shape_cast %195 : vector<1x2x8xi32> to vector<2x8xi32>
    %197 = vector.shape_cast %194 : vector<2x8xi32> to vector<1x2x8xi32>
    tpu.vector_store %arg8[%c3, %c0_51, %c0_52], %197 {strides = array<i32>} : memref<8x2x8xi32, #tpu.memory_space<vmem>>, vector<1x2x8xi32>,
    %cst_53 = arith.constant 0.000000e+00 : f32
    %198 = vector.broadcast %cst_53 : f32 to vector<2x1xf32>
    %199 = arith.cmpf ogt, %170, %198 : vector<2x1xf32>
    %200 = vector.shape_cast %199 : vector<2x1xi1> to vector<2x1xi1>
    %201 = vector.broadcast %200 : vector<2x1xi1> to vector<2x8xi1>
    %202 = arith.select %201, %187, %140 : vector<2x8xi1>, vector<2x8xf32>
    %203 = vector.shape_cast %157 : vector<2x8xf32> to vector<2x8x1xf32>
    %204 = vector.broadcast %203 : vector<2x8x1xf32> to vector<2x8x8xf32>
    %205 = arith.addf %204, %183 : vector<2x8x8xf32>
    %cst_54 = arith.constant dense<0xFF800000> : vector<2x8xf32>
    %206 = vector.multi_reduction <maximumf>, %205, %cst_54 [1] : vector<2x8x8xf32> to vector<2x8xf32>
    %207 = vector.shape_cast %206 : vector<2x8xf32> to vector<2x1x8xf32>
    %208 = vector.broadcast %207 : vector<2x1x8xf32> to vector<2x8x8xf32>
    %209 = arith.subf %205, %208 : vector<2x8x8xf32>
    %210 = math.exp %209 : vector<2x8x8xf32>
    %cst_55 = arith.constant dense<0.000000e+00> : vector<2x8xf32>
    %211 = vector.multi_reduction <add>, %210, %cst_55 [1] : vector<2x8x8xf32> to vector<2x8xf32>
    %212 = math.log %211 : vector<2x8xf32>
    %213 = vector.shape_cast %207 : vector<2x1x8xf32> to vector<2x8xf32>
    %214 = arith.addf %212, %213 : vector<2x8xf32>
    %cst_56 = arith.constant 0.000000e+00 : f32
    %215 = vector.broadcast %cst_56 : f32 to vector<2x1xf32>
    %216 = arith.cmpf ogt, %170, %215 : vector<2x1xf32>
    %217 = vector.shape_cast %216 : vector<2x1xi1> to vector<2x1xi1>
    %218 = vector.broadcast %217 : vector<2x1xi1> to vector<2x8xi1>
    %219 = arith.select %218, %214, %157 : vector<2x8xi1>, vector<2x8xf32>
    %220 = vector.extract_strided_slice %16 {offsets = [4, 0], sizes = [2, 8], strides = [1, 1]} : vector<16x8xf32> to vector<2x8xf32>
    %221 = arith.mulf %220, %169 : vector<2x8xf32>
    %cst_57 = arith.constant dense<0.000000e+00> : vector<2xf32>
    %222 = vector.multi_reduction <add>, %221, %cst_57 [1] : vector<2x8xf32> to vector<2xf32>
    %223 = vector.shape_cast %222 : vector<2xf32> to vector<2x1xf32>
    %224 = arith.mulf %169, %168 : vector<2x8xf32>
    %cst_58 = arith.constant dense<0.000000e+00> : vector<2xf32>
    %225 = vector.multi_reduction <add>, %224, %cst_58 [1] : vector<2x8xf32> to vector<2xf32>
    %226 = vector.shape_cast %225 : vector<2xf32> to vector<2x1xf32>
    %227 = arith.addf %223, %226 : vector<2x1xf32>
    %228 = arith.mulf %170, %227 : vector<2x1xf32>
    %229 = arith.addf %167, %228 : vector<2x1xf32>
    %230 = vector.extract_strided_slice %5 {offsets = [8, 0], sizes = [2, 8], strides = [1, 1]} : vector<16x8xf32> to vector<2x8xf32>
    %231 = vector.extract_strided_slice %15 {offsets = [8, 0], sizes = [2, 8], strides = [1, 1]} : vector<16x8xf32> to vector<2x8xf32>
    %232 = vector.extract_strided_slice %9 {offsets = [8, 0], sizes = [2, 1], strides = [1, 1]} : vector<16x1xf32> to vector<2x1xf32>
    %233 = vector.extract_strided_slice %9 {offsets = [10, 0], sizes = [2, 1], strides = [1, 1]} : vector<16x1xf32> to vector<2x1xf32>
    %234 = vector.broadcast %232 : vector<2x1xf32> to vector<2x8xf32>
    %235 = arith.mulf %231, %234 : vector<2x8xf32>
    %cst_59 = arith.constant 1.000000e+00 : f32
    %236 = vector.broadcast %cst_59 : f32 to vector<2x1xf32>
    %237 = arith.subf %236, %233 : vector<2x1xf32>
    %238 = vector.broadcast %237 : vector<2x1xf32> to vector<2x8xf32>
    %239 = arith.mulf %235, %238 : vector<2x8xf32>
    %240 = arith.addf %178, %239 : vector<2x8xf32>
    %241 = vector.shape_cast %6 : vector<8x8xf32> to vector<1x8x8xf32>
    %242 = vector.shape_cast %230 : vector<2x8xf32> to vector<2x1x8xf32>
    %243 = vector.broadcast %241 : vector<1x8x8xf32> to vector<2x8x8xf32>
    %244 = vector.broadcast %242 : vector<2x1x8xf32> to vector<2x8x8xf32>
    %245 = arith.addf %243, %244 : vector<2x8x8xf32>
    %246 = vector.shape_cast %202 : vector<2x8xf32> to vector<2x8x1xf32>
    %247 = vector.broadcast %246 : vector<2x8x1xf32> to vector<2x8x8xf32>
    %248 = arith.addf %247, %245 : vector<2x8x8xf32>
    %cst_60 = arith.constant dense<0xFF800000> : vector<2x8xf32>
    %249 = vector.multi_reduction <maximumf>, %248, %cst_60 [1] : vector<2x8x8xf32> to vector<2x8xf32>
    %250 = tpu.iota {dimensions = array<i32: 1>} : vector<2x8x8xi32>
    %251 = vector.shape_cast %249 : vector<2x8xf32> to vector<2x1x8xf32>
    %252 = vector.broadcast %251 : vector<2x1x8xf32> to vector<2x8x8xf32>
    %253 = arith.cmpf oge, %248, %252 : vector<2x8x8xf32>
    %c8_i32_61 = arith.constant 8 : i32
    %254 = vector.broadcast %c8_i32_61 : i32 to vector<2x8x8xi32>
    %255 = arith.select %253, %250, %254 : vector<2x8x8xi1>, vector<2x8x8xi32>
    %cst_62 = arith.constant dense<2147483647> : vector<2x8xi32>
    %256 = vector.multi_reduction <minsi>, %255, %cst_62 [1] : vector<2x8x8xi32> to vector<2x8xi32>
    %c4 = arith.constant 4 : index
    %c0_63 = arith.constant 0 : index
    %c0_64 = arith.constant 0 : index
    %257 = vector.load %arg8[%c4, %c0_63, %c0_64] : memref<8x2x8xi32, #tpu.memory_space<vmem>>, vector<1x2x8xi32>
    %258 = vector.shape_cast %257 : vector<1x2x8xi32> to vector<2x8xi32>
    %259 = vector.shape_cast %256 : vector<2x8xi32> to vector<1x2x8xi32>
    tpu.vector_store %arg8[%c4, %c0_63, %c0_64], %259 {strides = array<i32>} : memref<8x2x8xi32, #tpu.memory_space<vmem>>, vector<1x2x8xi32>,
    %cst_65 = arith.constant 0.000000e+00 : f32
    %260 = vector.broadcast %cst_65 : f32 to vector<2x1xf32>
    %261 = arith.cmpf ogt, %232, %260 : vector<2x1xf32>
    %262 = vector.shape_cast %261 : vector<2x1xi1> to vector<2x1xi1>
    %263 = vector.broadcast %262 : vector<2x1xi1> to vector<2x8xi1>
    %264 = arith.select %263, %249, %202 : vector<2x8xi1>, vector<2x8xf32>
    %265 = vector.shape_cast %219 : vector<2x8xf32> to vector<2x8x1xf32>
    %266 = vector.broadcast %265 : vector<2x8x1xf32> to vector<2x8x8xf32>
    %267 = arith.addf %266, %245 : vector<2x8x8xf32>
    %cst_66 = arith.constant dense<0xFF800000> : vector<2x8xf32>
    %268 = vector.multi_reduction <maximumf>, %267, %cst_66 [1] : vector<2x8x8xf32> to vector<2x8xf32>
    %269 = vector.shape_cast %268 : vector<2x8xf32> to vector<2x1x8xf32>
    %270 = vector.broadcast %269 : vector<2x1x8xf32> to vector<2x8x8xf32>
    %271 = arith.subf %267, %270 : vector<2x8x8xf32>
    %272 = math.exp %271 : vector<2x8x8xf32>
    %cst_67 = arith.constant dense<0.000000e+00> : vector<2x8xf32>
    %273 = vector.multi_reduction <add>, %272, %cst_67 [1] : vector<2x8x8xf32> to vector<2x8xf32>
    %274 = math.log %273 : vector<2x8xf32>
    %275 = vector.shape_cast %269 : vector<2x1x8xf32> to vector<2x8xf32>
    %276 = arith.addf %274, %275 : vector<2x8xf32>
    %cst_68 = arith.constant 0.000000e+00 : f32
    %277 = vector.broadcast %cst_68 : f32 to vector<2x1xf32>
    %278 = arith.cmpf ogt, %232, %277 : vector<2x1xf32>
    %279 = vector.shape_cast %278 : vector<2x1xi1> to vector<2x1xi1>
    %280 = vector.broadcast %279 : vector<2x1xi1> to vector<2x8xi1>
    %281 = arith.select %280, %276, %219 : vector<2x8xi1>, vector<2x8xf32>
    %282 = vector.extract_strided_slice %16 {offsets = [6, 0], sizes = [2, 8], strides = [1, 1]} : vector<16x8xf32> to vector<2x8xf32>
    %283 = arith.mulf %282, %231 : vector<2x8xf32>
    %cst_69 = arith.constant dense<0.000000e+00> : vector<2xf32>
    %284 = vector.multi_reduction <add>, %283, %cst_69 [1] : vector<2x8xf32> to vector<2xf32>
    %285 = vector.shape_cast %284 : vector<2xf32> to vector<2x1xf32>
    %286 = arith.mulf %231, %230 : vector<2x8xf32>
    %cst_70 = arith.constant dense<0.000000e+00> : vector<2xf32>
    %287 = vector.multi_reduction <add>, %286, %cst_70 [1] : vector<2x8xf32> to vector<2xf32>
    %288 = vector.shape_cast %287 : vector<2xf32> to vector<2x1xf32>
    %289 = arith.addf %285, %288 : vector<2x1xf32>
    %290 = arith.mulf %232, %289 : vector<2x1xf32>
    %291 = arith.addf %229, %290 : vector<2x1xf32>
    %292 = vector.extract_strided_slice %5 {offsets = [10, 0], sizes = [2, 8], strides = [1, 1]} : vector<16x8xf32> to vector<2x8xf32>
    %293 = vector.extract_strided_slice %15 {offsets = [10, 0], sizes = [2, 8], strides = [1, 1]} : vector<16x8xf32> to vector<2x8xf32>
    %294 = vector.extract_strided_slice %9 {offsets = [10, 0], sizes = [2, 1], strides = [1, 1]} : vector<16x1xf32> to vector<2x1xf32>
    %295 = vector.extract_strided_slice %9 {offsets = [12, 0], sizes = [2, 1], strides = [1, 1]} : vector<16x1xf32> to vector<2x1xf32>
    %296 = vector.broadcast %294 : vector<2x1xf32> to vector<2x8xf32>
    %297 = arith.mulf %293, %296 : vector<2x8xf32>
    %cst_71 = arith.constant 1.000000e+00 : f32
    %298 = vector.broadcast %cst_71 : f32 to vector<2x1xf32>
    %299 = arith.subf %298, %295 : vector<2x1xf32>
    %300 = vector.broadcast %299 : vector<2x1xf32> to vector<2x8xf32>
    %301 = arith.mulf %297, %300 : vector<2x8xf32>
    %302 = arith.addf %240, %301 : vector<2x8xf32>
    %303 = vector.shape_cast %6 : vector<8x8xf32> to vector<1x8x8xf32>
    %304 = vector.shape_cast %292 : vector<2x8xf32> to vector<2x1x8xf32>
    %305 = vector.broadcast %303 : vector<1x8x8xf32> to vector<2x8x8xf32>
    %306 = vector.broadcast %304 : vector<2x1x8xf32> to vector<2x8x8xf32>
    %307 = arith.addf %305, %306 : vector<2x8x8xf32>
    %308 = vector.shape_cast %264 : vector<2x8xf32> to vector<2x8x1xf32>
    %309 = vector.broadcast %308 : vector<2x8x1xf32> to vector<2x8x8xf32>
    %310 = arith.addf %309, %307 : vector<2x8x8xf32>
    %cst_72 = arith.constant dense<0xFF800000> : vector<2x8xf32>
    %311 = vector.multi_reduction <maximumf>, %310, %cst_72 [1] : vector<2x8x8xf32> to vector<2x8xf32>
    %312 = tpu.iota {dimensions = array<i32: 1>} : vector<2x8x8xi32>
    %313 = vector.shape_cast %311 : vector<2x8xf32> to vector<2x1x8xf32>
    %314 = vector.broadcast %313 : vector<2x1x8xf32> to vector<2x8x8xf32>
    %315 = arith.cmpf oge, %310, %314 : vector<2x8x8xf32>
    %c8_i32_73 = arith.constant 8 : i32
    %316 = vector.broadcast %c8_i32_73 : i32 to vector<2x8x8xi32>
    %317 = arith.select %315, %312, %316 : vector<2x8x8xi1>, vector<2x8x8xi32>
    %cst_74 = arith.constant dense<2147483647> : vector<2x8xi32>
    %318 = vector.multi_reduction <minsi>, %317, %cst_74 [1] : vector<2x8x8xi32> to vector<2x8xi32>
    %c5 = arith.constant 5 : index
    %c0_75 = arith.constant 0 : index
    %c0_76 = arith.constant 0 : index
    %319 = vector.load %arg8[%c5, %c0_75, %c0_76] : memref<8x2x8xi32, #tpu.memory_space<vmem>>, vector<1x2x8xi32>
    %320 = vector.shape_cast %319 : vector<1x2x8xi32> to vector<2x8xi32>
    %321 = vector.shape_cast %318 : vector<2x8xi32> to vector<1x2x8xi32>
    tpu.vector_store %arg8[%c5, %c0_75, %c0_76], %321 {strides = array<i32>} : memref<8x2x8xi32, #tpu.memory_space<vmem>>, vector<1x2x8xi32>,
    %cst_77 = arith.constant 0.000000e+00 : f32
    %322 = vector.broadcast %cst_77 : f32 to vector<2x1xf32>
    %323 = arith.cmpf ogt, %294, %322 : vector<2x1xf32>
    %324 = vector.shape_cast %323 : vector<2x1xi1> to vector<2x1xi1>
    %325 = vector.broadcast %324 : vector<2x1xi1> to vector<2x8xi1>
    %326 = arith.select %325, %311, %264 : vector<2x8xi1>, vector<2x8xf32>
    %327 = vector.shape_cast %281 : vector<2x8xf32> to vector<2x8x1xf32>
    %328 = vector.broadcast %327 : vector<2x8x1xf32> to vector<2x8x8xf32>
    %329 = arith.addf %328, %307 : vector<2x8x8xf32>
    %cst_78 = arith.constant dense<0xFF800000> : vector<2x8xf32>
    %330 = vector.multi_reduction <maximumf>, %329, %cst_78 [1] : vector<2x8x8xf32> to vector<2x8xf32>
    %331 = vector.shape_cast %330 : vector<2x8xf32> to vector<2x1x8xf32>
    %332 = vector.broadcast %331 : vector<2x1x8xf32> to vector<2x8x8xf32>
    %333 = arith.subf %329, %332 : vector<2x8x8xf32>
    %334 = math.exp %333 : vector<2x8x8xf32>
    %cst_79 = arith.constant dense<0.000000e+00> : vector<2x8xf32>
    %335 = vector.multi_reduction <add>, %334, %cst_79 [1] : vector<2x8x8xf32> to vector<2x8xf32>
    %336 = math.log %335 : vector<2x8xf32>
    %337 = vector.shape_cast %331 : vector<2x1x8xf32> to vector<2x8xf32>
    %338 = arith.addf %336, %337 : vector<2x8xf32>
    %cst_80 = arith.constant 0.000000e+00 : f32
    %339 = vector.broadcast %cst_80 : f32 to vector<2x1xf32>
    %340 = arith.cmpf ogt, %294, %339 : vector<2x1xf32>
    %341 = vector.shape_cast %340 : vector<2x1xi1> to vector<2x1xi1>
    %342 = vector.broadcast %341 : vector<2x1xi1> to vector<2x8xi1>
    %343 = arith.select %342, %338, %281 : vector<2x8xi1>, vector<2x8xf32>
    %344 = vector.extract_strided_slice %16 {offsets = [8, 0], sizes = [2, 8], strides = [1, 1]} : vector<16x8xf32> to vector<2x8xf32>
    %345 = arith.mulf %344, %293 : vector<2x8xf32>
    %cst_81 = arith.constant dense<0.000000e+00> : vector<2xf32>
    %346 = vector.multi_reduction <add>, %345, %cst_81 [1] : vector<2x8xf32> to vector<2xf32>
    %347 = vector.shape_cast %346 : vector<2xf32> to vector<2x1xf32>
    %348 = arith.mulf %293, %292 : vector<2x8xf32>
    %cst_82 = arith.constant dense<0.000000e+00> : vector<2xf32>
    %349 = vector.multi_reduction <add>, %348, %cst_82 [1] : vector<2x8xf32> to vector<2xf32>
    %350 = vector.shape_cast %349 : vector<2xf32> to vector<2x1xf32>
    %351 = arith.addf %347, %350 : vector<2x1xf32>
    %352 = arith.mulf %294, %351 : vector<2x1xf32>
    %353 = arith.addf %291, %352 : vector<2x1xf32>
    %354 = vector.extract_strided_slice %5 {offsets = [12, 0], sizes = [2, 8], strides = [1, 1]} : vector<16x8xf32> to vector<2x8xf32>
    %355 = vector.extract_strided_slice %15 {offsets = [12, 0], sizes = [2, 8], strides = [1, 1]} : vector<16x8xf32> to vector<2x8xf32>
    %356 = vector.extract_strided_slice %9 {offsets = [12, 0], sizes = [2, 1], strides = [1, 1]} : vector<16x1xf32> to vector<2x1xf32>
    %357 = vector.extract_strided_slice %9 {offsets = [14, 0], sizes = [2, 1], strides = [1, 1]} : vector<16x1xf32> to vector<2x1xf32>
    %358 = vector.broadcast %356 : vector<2x1xf32> to vector<2x8xf32>
    %359 = arith.mulf %355, %358 : vector<2x8xf32>
    %cst_83 = arith.constant 1.000000e+00 : f32
    %360 = vector.broadcast %cst_83 : f32 to vector<2x1xf32>
    %361 = arith.subf %360, %357 : vector<2x1xf32>
    %362 = vector.broadcast %361 : vector<2x1xf32> to vector<2x8xf32>
    %363 = arith.mulf %359, %362 : vector<2x8xf32>
    %364 = arith.addf %302, %363 : vector<2x8xf32>
    %365 = vector.shape_cast %6 : vector<8x8xf32> to vector<1x8x8xf32>
    %366 = vector.shape_cast %354 : vector<2x8xf32> to vector<2x1x8xf32>
    %367 = vector.broadcast %365 : vector<1x8x8xf32> to vector<2x8x8xf32>
    %368 = vector.broadcast %366 : vector<2x1x8xf32> to vector<2x8x8xf32>
    %369 = arith.addf %367, %368 : vector<2x8x8xf32>
    %370 = vector.shape_cast %326 : vector<2x8xf32> to vector<2x8x1xf32>
    %371 = vector.broadcast %370 : vector<2x8x1xf32> to vector<2x8x8xf32>
    %372 = arith.addf %371, %369 : vector<2x8x8xf32>
    %cst_84 = arith.constant dense<0xFF800000> : vector<2x8xf32>
    %373 = vector.multi_reduction <maximumf>, %372, %cst_84 [1] : vector<2x8x8xf32> to vector<2x8xf32>
    %374 = tpu.iota {dimensions = array<i32: 1>} : vector<2x8x8xi32>
    %375 = vector.shape_cast %373 : vector<2x8xf32> to vector<2x1x8xf32>
    %376 = vector.broadcast %375 : vector<2x1x8xf32> to vector<2x8x8xf32>
    %377 = arith.cmpf oge, %372, %376 : vector<2x8x8xf32>
    %c8_i32_85 = arith.constant 8 : i32
    %378 = vector.broadcast %c8_i32_85 : i32 to vector<2x8x8xi32>
    %379 = arith.select %377, %374, %378 : vector<2x8x8xi1>, vector<2x8x8xi32>
    %cst_86 = arith.constant dense<2147483647> : vector<2x8xi32>
    %380 = vector.multi_reduction <minsi>, %379, %cst_86 [1] : vector<2x8x8xi32> to vector<2x8xi32>
    %c6 = arith.constant 6 : index
    %c0_87 = arith.constant 0 : index
    %c0_88 = arith.constant 0 : index
    %381 = vector.load %arg8[%c6, %c0_87, %c0_88] : memref<8x2x8xi32, #tpu.memory_space<vmem>>, vector<1x2x8xi32>
    %382 = vector.shape_cast %381 : vector<1x2x8xi32> to vector<2x8xi32>
    %383 = vector.shape_cast %380 : vector<2x8xi32> to vector<1x2x8xi32>
    tpu.vector_store %arg8[%c6, %c0_87, %c0_88], %383 {strides = array<i32>} : memref<8x2x8xi32, #tpu.memory_space<vmem>>, vector<1x2x8xi32>,
    %cst_89 = arith.constant 0.000000e+00 : f32
    %384 = vector.broadcast %cst_89 : f32 to vector<2x1xf32>
    %385 = arith.cmpf ogt, %356, %384 : vector<2x1xf32>
    %386 = vector.shape_cast %385 : vector<2x1xi1> to vector<2x1xi1>
    %387 = vector.broadcast %386 : vector<2x1xi1> to vector<2x8xi1>
    %388 = arith.select %387, %373, %326 : vector<2x8xi1>, vector<2x8xf32>
    %389 = vector.shape_cast %343 : vector<2x8xf32> to vector<2x8x1xf32>
    %390 = vector.broadcast %389 : vector<2x8x1xf32> to vector<2x8x8xf32>
    %391 = arith.addf %390, %369 : vector<2x8x8xf32>
    %cst_90 = arith.constant dense<0xFF800000> : vector<2x8xf32>
    %392 = vector.multi_reduction <maximumf>, %391, %cst_90 [1] : vector<2x8x8xf32> to vector<2x8xf32>
    %393 = vector.shape_cast %392 : vector<2x8xf32> to vector<2x1x8xf32>
    %394 = vector.broadcast %393 : vector<2x1x8xf32> to vector<2x8x8xf32>
    %395 = arith.subf %391, %394 : vector<2x8x8xf32>
    %396 = math.exp %395 : vector<2x8x8xf32>
    %cst_91 = arith.constant dense<0.000000e+00> : vector<2x8xf32>
    %397 = vector.multi_reduction <add>, %396, %cst_91 [1] : vector<2x8x8xf32> to vector<2x8xf32>
    %398 = math.log %397 : vector<2x8xf32>
    %399 = vector.shape_cast %393 : vector<2x1x8xf32> to vector<2x8xf32>
    %400 = arith.addf %398, %399 : vector<2x8xf32>
    %cst_92 = arith.constant 0.000000e+00 : f32
    %401 = vector.broadcast %cst_92 : f32 to vector<2x1xf32>
    %402 = arith.cmpf ogt, %356, %401 : vector<2x1xf32>
    %403 = vector.shape_cast %402 : vector<2x1xi1> to vector<2x1xi1>
    %404 = vector.broadcast %403 : vector<2x1xi1> to vector<2x8xi1>
    %405 = arith.select %404, %400, %343 : vector<2x8xi1>, vector<2x8xf32>
    %406 = vector.extract_strided_slice %16 {offsets = [10, 0], sizes = [2, 8], strides = [1, 1]} : vector<16x8xf32> to vector<2x8xf32>
    %407 = arith.mulf %406, %355 : vector<2x8xf32>
    %cst_93 = arith.constant dense<0.000000e+00> : vector<2xf32>
    %408 = vector.multi_reduction <add>, %407, %cst_93 [1] : vector<2x8xf32> to vector<2xf32>
    %409 = vector.shape_cast %408 : vector<2xf32> to vector<2x1xf32>
    %410 = arith.mulf %355, %354 : vector<2x8xf32>
    %cst_94 = arith.constant dense<0.000000e+00> : vector<2xf32>
    %411 = vector.multi_reduction <add>, %410, %cst_94 [1] : vector<2x8xf32> to vector<2xf32>
    %412 = vector.shape_cast %411 : vector<2xf32> to vector<2x1xf32>
    %413 = arith.addf %409, %412 : vector<2x1xf32>
    %414 = arith.mulf %356, %413 : vector<2x1xf32>
    %415 = arith.addf %353, %414 : vector<2x1xf32>
    %416 = vector.extract_strided_slice %5 {offsets = [14, 0], sizes = [2, 8], strides = [1, 1]} : vector<16x8xf32> to vector<2x8xf32>
    %417 = vector.extract_strided_slice %15 {offsets = [14, 0], sizes = [2, 8], strides = [1, 1]} : vector<16x8xf32> to vector<2x8xf32>
    %418 = vector.extract_strided_slice %9 {offsets = [14, 0], sizes = [2, 1], strides = [1, 1]} : vector<16x1xf32> to vector<2x1xf32>
    %419 = vector.broadcast %418 : vector<2x1xf32> to vector<2x8xf32>
    %420 = arith.mulf %417, %419 : vector<2x8xf32>
    %cst_95 = arith.constant 1.000000e+00 : f32
    %421 = vector.broadcast %cst_95 : f32 to vector<2x1xf32>
    %422 = arith.subf %421, %17 : vector<2x1xf32>
    %423 = vector.broadcast %422 : vector<2x1xf32> to vector<2x8xf32>
    %424 = arith.mulf %420, %423 : vector<2x8xf32>
    %425 = arith.addf %364, %424 : vector<2x8xf32>
    %426 = vector.shape_cast %6 : vector<8x8xf32> to vector<1x8x8xf32>
    %427 = vector.shape_cast %416 : vector<2x8xf32> to vector<2x1x8xf32>
    %428 = vector.broadcast %426 : vector<1x8x8xf32> to vector<2x8x8xf32>
    %429 = vector.broadcast %427 : vector<2x1x8xf32> to vector<2x8x8xf32>
    %430 = arith.addf %428, %429 : vector<2x8x8xf32>
    %431 = vector.shape_cast %388 : vector<2x8xf32> to vector<2x8x1xf32>
    %432 = vector.broadcast %431 : vector<2x8x1xf32> to vector<2x8x8xf32>
    %433 = arith.addf %432, %430 : vector<2x8x8xf32>
    %cst_96 = arith.constant dense<0xFF800000> : vector<2x8xf32>
    %434 = vector.multi_reduction <maximumf>, %433, %cst_96 [1] : vector<2x8x8xf32> to vector<2x8xf32>
    %435 = tpu.iota {dimensions = array<i32: 1>} : vector<2x8x8xi32>
    %436 = vector.shape_cast %434 : vector<2x8xf32> to vector<2x1x8xf32>
    %437 = vector.broadcast %436 : vector<2x1x8xf32> to vector<2x8x8xf32>
    %438 = arith.cmpf oge, %433, %437 : vector<2x8x8xf32>
    %c8_i32_97 = arith.constant 8 : i32
    %439 = vector.broadcast %c8_i32_97 : i32 to vector<2x8x8xi32>
    %440 = arith.select %438, %435, %439 : vector<2x8x8xi1>, vector<2x8x8xi32>
    %cst_98 = arith.constant dense<2147483647> : vector<2x8xi32>
    %441 = vector.multi_reduction <minsi>, %440, %cst_98 [1] : vector<2x8x8xi32> to vector<2x8xi32>
    %c7 = arith.constant 7 : index
    %c0_99 = arith.constant 0 : index
    %c0_100 = arith.constant 0 : index
    %442 = vector.load %arg8[%c7, %c0_99, %c0_100] : memref<8x2x8xi32, #tpu.memory_space<vmem>>, vector<1x2x8xi32>
    %443 = vector.shape_cast %442 : vector<1x2x8xi32> to vector<2x8xi32>
    %444 = vector.shape_cast %441 : vector<2x8xi32> to vector<1x2x8xi32>
    tpu.vector_store %arg8[%c7, %c0_99, %c0_100], %444 {strides = array<i32>} : memref<8x2x8xi32, #tpu.memory_space<vmem>>, vector<1x2x8xi32>,
    %cst_101 = arith.constant 0.000000e+00 : f32
    %445 = vector.broadcast %cst_101 : f32 to vector<2x1xf32>
    %446 = arith.cmpf ogt, %418, %445 : vector<2x1xf32>
    %447 = vector.shape_cast %446 : vector<2x1xi1> to vector<2x1xi1>
    %448 = vector.broadcast %447 : vector<2x1xi1> to vector<2x8xi1>
    %449 = arith.select %448, %434, %388 : vector<2x8xi1>, vector<2x8xf32>
    %450 = vector.shape_cast %405 : vector<2x8xf32> to vector<2x8x1xf32>
    %451 = vector.broadcast %450 : vector<2x8x1xf32> to vector<2x8x8xf32>
    %452 = arith.addf %451, %430 : vector<2x8x8xf32>
    %cst_102 = arith.constant dense<0xFF800000> : vector<2x8xf32>
    %453 = vector.multi_reduction <maximumf>, %452, %cst_102 [1] : vector<2x8x8xf32> to vector<2x8xf32>
    %454 = vector.shape_cast %453 : vector<2x8xf32> to vector<2x1x8xf32>
    %455 = vector.broadcast %454 : vector<2x1x8xf32> to vector<2x8x8xf32>
    %456 = arith.subf %452, %455 : vector<2x8x8xf32>
    %457 = math.exp %456 : vector<2x8x8xf32>
    %cst_103 = arith.constant dense<0.000000e+00> : vector<2x8xf32>
    %458 = vector.multi_reduction <add>, %457, %cst_103 [1] : vector<2x8x8xf32> to vector<2x8xf32>
    %459 = math.log %458 : vector<2x8xf32>
    %460 = vector.shape_cast %454 : vector<2x1x8xf32> to vector<2x8xf32>
    %461 = arith.addf %459, %460 : vector<2x8xf32>
    %cst_104 = arith.constant 0.000000e+00 : f32
    %462 = vector.broadcast %cst_104 : f32 to vector<2x1xf32>
    %463 = arith.cmpf ogt, %418, %462 : vector<2x1xf32>
    %464 = vector.shape_cast %463 : vector<2x1xi1> to vector<2x1xi1>
    %465 = vector.broadcast %464 : vector<2x1xi1> to vector<2x8xi1>
    %466 = arith.select %465, %461, %405 : vector<2x8xi1>, vector<2x8xf32>
    %467 = vector.extract_strided_slice %16 {offsets = [12, 0], sizes = [2, 8], strides = [1, 1]} : vector<16x8xf32> to vector<2x8xf32>
    %468 = arith.mulf %467, %417 : vector<2x8xf32>
    %cst_105 = arith.constant dense<0.000000e+00> : vector<2xf32>
    %469 = vector.multi_reduction <add>, %468, %cst_105 [1] : vector<2x8xf32> to vector<2xf32>
    %470 = vector.shape_cast %469 : vector<2xf32> to vector<2x1xf32>
    %471 = arith.mulf %417, %416 : vector<2x8xf32>
    %cst_106 = arith.constant dense<0.000000e+00> : vector<2xf32>
    %472 = vector.multi_reduction <add>, %471, %cst_106 [1] : vector<2x8xf32> to vector<2xf32>
    %473 = vector.shape_cast %472 : vector<2xf32> to vector<2x1xf32>
    %474 = arith.addf %470, %473 : vector<2x1xf32>
    %475 = arith.mulf %418, %474 : vector<2x1xf32>
    %476 = arith.addf %415, %475 : vector<2x1xf32>
    %477 = vector.broadcast %8 : vector<1x8xf32> to vector<2x8xf32>
    %478 = arith.addf %449, %477 : vector<2x8xf32>
    %c0_107 = arith.constant 0 : index
    %c0_108 = arith.constant 0 : index
    %479 = vector.load %arg9[%c0_107, %c0_108] : memref<2x8xf32, #tpu.memory_space<vmem>>, vector<2x8xf32>
    tpu.vector_store %arg9[%c0_107, %c0_108], %478 {strides = array<i32>} : memref<2x8xf32, #tpu.memory_space<vmem>>, vector<2x8xf32>,
    %480 = vector.broadcast %8 : vector<1x8xf32> to vector<2x8xf32>
    %481 = arith.addf %466, %480 : vector<2x8xf32>
    %cst_109 = arith.constant dense<0xFF800000> : vector<2xf32>
    %482 = vector.multi_reduction <maximumf>, %481, %cst_109 [1] : vector<2x8xf32> to vector<2xf32>
    %483 = vector.shape_cast %482 : vector<2xf32> to vector<2x1xf32>
    %484 = vector.broadcast %483 : vector<2x1xf32> to vector<2x8xf32>
    %485 = arith.subf %481, %484 : vector<2x8xf32>
    %486 = math.exp %485 : vector<2x8xf32>
    %cst_110 = arith.constant dense<0.000000e+00> : vector<2xf32>
    %487 = vector.multi_reduction <add>, %486, %cst_110 [1] : vector<2x8xf32> to vector<2xf32>
    %488 = vector.shape_cast %487 : vector<2xf32> to vector<2x1xf32>
    %489 = math.log %488 : vector<2x1xf32>
    %490 = arith.addf %489, %483 : vector<2x1xf32>
    %491 = vector.broadcast %8 : vector<1x8xf32> to vector<2x8xf32>
    %492 = arith.mulf %425, %491 : vector<2x8xf32>
    %cst_111 = arith.constant dense<0.000000e+00> : vector<2xf32>
    %493 = vector.multi_reduction <add>, %492, %cst_111 [1] : vector<2x8xf32> to vector<2xf32>
    %494 = vector.shape_cast %493 : vector<2xf32> to vector<2x1xf32>
    %495 = arith.addf %476, %494 : vector<2x1xf32>
    %496 = arith.subf %490, %495 : vector<2x1xf32>
    %c0_112 = arith.constant 0 : index
    %c0_113 = arith.constant 0 : index
    %497 = vector.load %arg10[%c0_112, %c0_113] : memref<2x1xf32, #tpu.memory_space<vmem>>, vector<2x1xf32>
    tpu.vector_store %arg10[%c0_112, %c0_113], %496 {strides = array<i32>} : memref<2x1xf32, #tpu.memory_space<vmem>>, vector<2x1xf32>,
    return
  }
}

</mosaic_0001>

<llo_original>
// kernel: custom-call.5
$region0: #{custom-call.5}
  %s0 = inlined_call_operand.vmem [shape: s32[8,2], index: 0, kind: output, shape index: {}]

// kernel: _lambda_.1
$region0: #{_lambda_.1}
  #allocation0 [shape = 'u32[]', space=smem, size = 0x4, offset = 0x4, fixed_abs, tag = 'smem constant byte address 0x4 - core index']
  #allocation1 [shape = 'u32[72,128]{1,0:T(1,128)}', space=vmem, size = 0x9000, scoped, tag = 'internal scratch']
  %s0 = inlined_call_operand.vmem [shape: f32[16,64], index: 0, kind: input, shape index: {}]
  %s1 = inlined_call_operand.vmem [shape: f32[16,1], index: 1, kind: input, shape index: {}]
  %s2 = inlined_call_operand.vmem [shape: s32[16,1], index: 2, kind: input, shape index: {}]
  %s3 = inlined_call_operand.hbm [shape: f32[64,8], index: 3, kind: input, shape index: {}]
  %s4 = inlined_call_operand.vmem [shape: f32[1,8], index: 4, kind: input, shape index: {}]
  %s5 = inlined_call_operand.vmem [shape: f32[8,8], index: 5, kind: input, shape index: {}]
  %s6 = inlined_call_operand.vmem [shape: f32[1,8], index: 6, kind: input, shape index: {}]
  %s7 = inlined_call_operand.vmem [shape: f32[1,8], index: 7, kind: input, shape index: {}]
  %s8 = inlined_call_operand.vmem [shape: s32[8,2,8], index: 8, kind: output, shape index: {0}]
  %s9 = inlined_call_operand.vmem [shape: f32[2,8], index: 9, kind: output, shape index: {1}]
  %s10 = inlined_call_operand.vmem [shape: f32[2,1], index: 10, kind: output, shape index: {2}]
  %11 = xla_tuple %s8, %s9, %s10
  %s12 = sld [smem:[#allocation0]]
  $region62: #{_lambda_.1} parent=0
    _
  %s14 = ssub.s32 1, %s12
  %s15 = scalar_select 0, %s14, %s12
  $region1: #{_lambda_.1} parent=0
    #allocation2 [shape = 'u8[32768]{0}', space=vmem, size = 0x8000, scoped, tag = 'input window, operand 3, single buffered']
    #allocation3 [shape = 's32[1]{0}', space=sflag, size = 0x4, scoped, tag = 'scoped memory for _lambda_.1']
    %16 = vsyncpa [#allocation3], 0
    // Predicated region
    $region2: #{_lambda_.1} parent=1 // pred_check
      _
    $region3: #{_lambda_.1} parent=1 // pred_check_branch
      %18 = sbr.rel (0) target = $region5
    $region4: #{_lambda_.1} parent=1 // pred_region
      _
    $region5: #{_lambda_.1} parent=1 // pred_fallthru
      _
    // Predicated region
    $region6: #{_lambda_.1} parent=1 // pred_check
      _
    $region7: #{_lambda_.1} parent=1 // pred_check_branch
      %20 = sbr.rel (0) target = $region9
    $region8: #{_lambda_.1} parent=1 // pred_region
      _
    $region9: #{_lambda_.1} parent=1 // pred_fallthru
      _
    // Predicated region
    $region10: #{_lambda_.1} parent=1 // pred_check
      _
    $region11: #{_lambda_.1} parent=1 // pred_check_branch
      %22 = sbr.rel (0) target = $region13
    $region12: #{_lambda_.1} parent=1 // pred_region
      _
    $region13: #{_lambda_.1} parent=1 // pred_fallthru
      _
    // Predicated region
    $region14: #{_lambda_.1} parent=1 // pred_check
      _
    $region15: #{_lambda_.1} parent=1 // pred_check_branch
      %24 = sbr.rel (0) target = $region17
    $region16: #{_lambda_.1} parent=1 // pred_region
      %26 = vsyncadd [#allocation3], 0
      %s27 = sshll.u32 %s3, 4
      %s28 = int_to_ptr.hbm [resolvable:$true] %s27
      %s29 = sshll.u32 [#allocation2], 4
      %s30 = int_to_ptr.vmem [resolvable:$true] %s29
      %35 = dma.hbm_to_vmem [thread:$0]  %s28, 1024, %s30, [#allocation3], 128, 128, 8
    $region17: #{_lambda_.1} parent=1 // pred_fallthru
      _
    // Predicated region
    $region18: #{_lambda_.1} parent=1 // pred_check
      _
    $region19: #{_lambda_.1} parent=1 // pred_check_branch
      %37 = sbr.rel (0) target = $region21
    $region20: #{_lambda_.1} parent=1 // pred_region
      _
    $region21: #{_lambda_.1} parent=1 // pred_fallthru
      _
    // Predicated region
    $region22: #{_lambda_.1} parent=1 // pred_check
      _
    $region23: #{_lambda_.1} parent=1 // pred_check_branch
      %39 = sbr.rel (0) target = $region25
    $region24: #{_lambda_.1} parent=1 // pred_region
      _
    $region25: #{_lambda_.1} parent=1 // pred_fallthru
      _
    // Predicated region
    $region26: #{_lambda_.1} parent=1 // pred_check
      _
    $region27: #{_lambda_.1} parent=1 // pred_check_branch
      %41 = sbr.rel (0) target = $region29
    $region28: #{_lambda_.1} parent=1 // pred_region
      _
    $region29: #{_lambda_.1} parent=1 // pred_fallthru
      _
    // Predicated region
    $region30: #{_lambda_.1} parent=1 // pred_check
      _
    $region31: #{_lambda_.1} parent=1 // pred_check_branch
      %43 = sbr.rel (0) target = $region33
    $region32: #{_lambda_.1} parent=1 // pred_region
      _
    $region33: #{_lambda_.1} parent=1 // pred_fallthru
      _
    // Predicated region
    $region34: #{_lambda_.1} parent=1 // pred_check
      _
    $region35: #{_lambda_.1} parent=1 // pred_check_branch
      %45 = sbr.rel (0) target = $region37
    $region36: #{_lambda_.1} parent=1 // pred_region
      %47 = dma.done [#allocation3], 1024
    $region37: #{_lambda_.1} parent=1 // pred_fallthru
      _
    %v48 = vld [vmem:[%s0] sm:$0xff]
    %v49 = vld [vmem:[%s0 + $0x8] sm:$0xff]
    %v50 = vld [vmem:[#allocation2] sm:$0xff]
    %v51 = vld [vmem:[#allocation2 + $0x8] sm:$0xff]
    %v52 = vld [vmem:[#allocation2 + $0x10] sm:$0xff]
    %v53 = vld [vmem:[#allocation2 + $0x18] sm:$0xff]
    %v54 = vld [vmem:[#allocation2 + $0x20] sm:$0xff]
    %v55 = vld [vmem:[#allocation2 + $0x28] sm:$0xff]
    %v56 = vld [vmem:[#allocation2 + $0x30] sm:$0xff]
    %v57 = vld [vmem:[#allocation2 + $0x38] sm:$0xff]
    %v58 = vld [vmem:[%s4] sm:$0x1]
    %v60 = vperm.slane %v58, 0
    %vm62 = vcmask 523264
    %v64 = vsel %vm62, %v48, 0
    %v67 = vsel %vm62, %v49, 0
    %69 = vmatpush.msra.mxu0 0.0
    %70 = vmatpush.msra.mxu0 0.0
    %71 = vmatpush.msra.mxu0 0.0
    %72 = vmatpush.msra.mxu0 0.0
    %73 = vmatpush.msra.mxu0 0.0
    %74 = vmatpush.msra.mxu0 0.0
    %75 = vmatpush.msra.mxu0 0.0
    %76 = vmatpush.msra.mxu0 0.0
    %77 = vmatpush.msra.mxu0 %v57
    %78 = vmatpush.msra.mxu0 %v56
    %79 = vmatpush.msra.mxu0 %v55
    %80 = vmatpush.msra.mxu0 %v54
    %81 = vmatpush.msra.mxu0 %v53
    %82 = vmatpush.msra.mxu0 %v52
    %83 = vmatpush.msra.mxu0 %v51
    %84 = vmatpush.msra.mxu0 %v50
    %85 = vmatmul.f32.gmra.mxu0 %v64
    %v86 = vpop.f32.mrf.mxu0
    %v87 = vadd.f32 %v60, %v86
    %88 = vmatmul.f32.gmra.mxu0 %v67
    %v89 = vpop.f32.mrf.mxu0
    %v90 = vadd.f32 %v60, %v89
    %91 = vdwg.mxu0
    %v92 = vld [vmem:[%s5] sm:$0xff]
    %v93 = vld [vmem:[%s6] sm:$0x1]
    %v94 = vld [vmem:[%s7] sm:$0x1]
    %v95 = vld [vmem:[%s1] sm:$0xff]
    %v96 = vld [vmem:[%s1 + $0x8] sm:$0xff]
    %v97 = vlaneseq
    %v98 = vand.u32 %v97, 127
    %v99 = vld [vmem:[%s2] sm:$0xff]
    %v100 = vld [vmem:[%s2 + $0x8] sm:$0xff]
    %101 = vset.pattern.permute.xlu0 0
    %102 = vperm.xlu0 %101, %v99
    %v103 = vpop.permute.xlu0 %102
    %104 = vset.pattern.permute.xlu0 0
    %105 = vperm.xlu0 %104, %v100
    %v106 = vpop.permute.xlu0 %105
    %vm107 = vcmp.eq.s32.totalorder %v98, %v103
    %vm108 = vcmp.eq.s32.totalorder %v98, %v106
    %v109 = vsel %vm107, 1, 0
    %v110 = vsel %vm108, 1, 0
    %v111 = vcvt.s32.f32 %v109
    %v112 = vcvt.s32.f32 %v110
    %vm113 = vcmask 64512
    %v115 = vsel %vm113, %v111, 0
    %v118 = vsel %vm113, %v112, 0
    %120 = vmatpush.msra.mxu0 0.0
    %121 = vmatpush.msra.mxu0 0.0
    %122 = vmatpush.msra.mxu0 0.0
    %123 = vmatpush.msra.mxu0 0.0
    %124 = vmatpush.msra.mxu0 0.0
    %125 = vmatpush.msra.mxu0 0.0
    %126 = vmatpush.msra.mxu0 0.0
    %127 = vmatpush.msra.mxu0 0.0
    %128 = vmatpush.msra.mxu0 0.0
    %129 = vmatpush.msra.mxu0 0.0
    %130 = vmatpush.msra.mxu0 0.0
    %131 = vmatpush.msra.mxu0 0.0
    %132 = vmatpush.msra.mxu0 0.0
    %133 = vmatpush.msra.mxu0 0.0
    %134 = vmatpush.msra.mxu0 0.0
    %135 = vmatpush.msra.mxu0 %v92
    %136 = vmatmul.f32.gmra.mxu0 %v115
    %v137 = vpop.f32.mrf.mxu0
    %v138 = vadd.f32 0.0, %v137
    %139 = vmatmul.f32.gmra.mxu0 %v118
    %v140 = vpop.f32.mrf.mxu0
    %v141 = vadd.f32 0.0, %v140
    %142 = vdwg.mxu0
    %144 = vset.pattern.permute.xlu0 0
    %145 = vperm.xlu0 %144, %v95
    %v146 = vpop.permute.xlu0 %145
    %v148 = vmul.f32 %v111, %v146
    %v149 = vsub.f32 1.0, %v95
    %151 = vset.pattern.permute.xlu0 0
    %152 = vperm.xlu0 %151, %v149
    %v153 = vpop.permute.xlu0 %152
    %v154 = vrot.slane %v153, 2
    %v156 = vmul.f32 %v148, %v154
    %v157 = vadd.f32 %v156, 0.0
    %v159 = vperm.slane %v93, 0
    %v161 = vadd.f32 %v159, %v87
    %vm162 = vcmask 58368
    %163 = vst.msk [vmem:[%s8] sm:$0x3] %vm162, 0
    %v164 = vmul.f32 %v111, %v159
    %v165 = vsel %vm162, %v164, 0.0
    %166 = vadd.xlane.f32.xlu0 %v165
    %v167 = vpop.xlane.xlu0 %166
    %v168 = vmul.f32 %v111, %v87
    %v169 = vsel %vm162, %v168, 0.0
    %170 = vadd.xlane.f32.xlu0 %v169
    %v171 = vpop.xlane.xlu0 %170
    %v172 = vadd.f32 %v167, %v171
    %v174 = vrot.slane %v156, 2
    %v176 = vadd.f32 %v157, %v174
    %178 = vst [vmem:[#allocation1] sm:$0xff] %v87
    %s179 = scalar_lea.vmem [#allocation1], 2
    %v180 = vld [vmem:[%s179] ss:$9 sm:$0xff]
    %s181 = scalar_lea.vmem [#allocation1], 3
    %v182 = vld [vmem:[%s181] ss:$9 sm:$0xff]
    %v183 = vperm.slane %v180, 0
    %v184 = vperm.slane %v182, 0
    %v187 = vadd.f32 %v92, %v183
    %v188 = vadd.f32 %v92, %v184
    %v189 = vperm.slane %v161, 0
    %v190 = vlaneseq
    %v191 = vshrl.u32 %v190, 7
    %193 = vset.pattern.permute.xlu0 %v191
    %194 = vperm.xlu0 %193, %v189
    %v195 = vpop.permute.xlu0 %194
    %v196 = vperm.slane %v161, 1
    %v197 = vlaneseq
    %v198 = vshrl.u32 %v197, 7
    %200 = vset.pattern.permute.xlu0 %v198
    %201 = vperm.xlu0 %200, %v196
    %v202 = vpop.permute.xlu0 %201
    %v203 = vadd.f32 %v195, %v187
    %v204 = vadd.f32 %v202, %v188
    %v205 = vsel %vm113, %v203, -inf
    %v206 = vrot.slane %v205, 4
    %v207 = vmax.f32 %v205, %v206
    %v208 = vrot.slane %v207, 2
    %v209 = vmax.f32 %v207, %v208
    %v210 = vrot.slane %v209, 1
    %v211 = vmax.f32 %v209, %v210
    %v212 = vsel %vm113, %v204, -inf
    %v213 = vrot.slane %v212, 4
    %v214 = vmax.f32 %v212, %v213
    %v215 = vrot.slane %v214, 2
    %v216 = vmax.f32 %v214, %v215
    %v217 = vrot.slane %v216, 1
    %v218 = vmax.f32 %v216, %v217
    %v219 = vlaneseq
    %v220 = vshrl.u32 %v219, 7
    %vm221 = vcmp.ge.f32.partialorder %v203, %v211
    %vm222 = vcmp.ge.f32.partialorder %v204, %v218
    %v223 = vsel %vm221, %v220, 8
    %v224 = vsel %vm222, %v220, 8
    %v225 = vsel %vm113, %v223, 2147483647
    %v226 = vrot.slane %v225, 4
    %vm227 = vcmp.lt.s32.totalorder %v225, %v226
    %v228 = vsel %vm227, %v225, %v226
    %v229 = vrot.slane %v228, 2
    %vm230 = vcmp.lt.s32.totalorder %v228, %v229
    %v231 = vsel %vm230, %v228, %v229
    %v232 = vrot.slane %v231, 1
    %vm233 = vcmp.lt.s32.totalorder %v231, %v232
    %v234 = vsel %vm233, %v231, %v232
    %v235 = vsel %vm113, %v224, 2147483647
    %v236 = vrot.slane %v235, 4
    %vm237 = vcmp.lt.s32.totalorder %v235, %v236
    %v238 = vsel %vm237, %v235, %v236
    %v239 = vrot.slane %v238, 2
    %vm240 = vcmp.lt.s32.totalorder %v238, %v239
    %v241 = vsel %vm240, %v238, %v239
    %v242 = vrot.slane %v241, 1
    %vm243 = vcmp.lt.s32.totalorder %v241, %v242
    %v244 = vsel %vm243, %v241, %v242
    %vm245 = vcmask 1041409
    %v246 = vsel %vm245, %v244, %v234
    %s247 = scalar_lea.vmem %s8, 2
    %248 = vst.msk [vmem:[%s247] sm:$0x3] %vm162, %v246
    %vm249 = vcmp.gt.f32.partialorder %v95, 0.0
    %v250 = vsel %vm249, 1, 0
    %251 = vset.pattern.permute.xlu0 0
    %252 = vperm.xlu0 %251, %v250
    %v253 = vpop.permute.xlu0 %252
    %vm254 = vcmp.eq.s32.totalorder %v253, 1
    %vm257 = vcmask 1043459
    %v258 = vsel %vm257, %v218, %v211
    %v261 = vrot.slane %v161, 6
    %v263 = vsel %vm254, %v258, %v261
    %v264 = vsub.f32 %v203, %v211
    %v265 = vsub.f32 %v204, %v218
    %v266 = vmul.f32 %v264, 1.442695
    %v267 = vpow.pop %v266
    %v268 = vmul.f32 %v265, 1.442695
    %v269 = vpow.pop %v268
    %v270 = vsel %vm113, %v267, 0.0
    %v271 = vrot.slane %v270, 4
    %v272 = vadd.f32 %v270, %v271
    %v273 = vrot.slane %v272, 2
    %v274 = vadd.f32 %v272, %v273
    %v275 = vrot.slane %v274, 1
    %v276 = vadd.f32 %v274, %v275
    %v277 = vsel %vm113, %v269, 0.0
    %v278 = vrot.slane %v277, 4
    %v279 = vadd.f32 %v277, %v278
    %v280 = vrot.slane %v279, 2
    %v281 = vadd.f32 %v279, %v280
    %v282 = vrot.slane %v281, 1
    %v283 = vadd.f32 %v281, %v282
    %v284 = vlog2.pop %v276
    %v285 = vmul.f32 %v284, 0.6931472
    %v286 = vlog2.pop %v283
    %v287 = vmul.f32 %v286, 0.6931472
    %v288 = vadd.f32 %v285, %v211
    %v289 = vadd.f32 %v287, %v218
    %v292 = vsel %vm257, %v289, %v288
    %v294 = vsel %vm254, %v292, %v261
    %v295 = vrot.slane %v111, 2
    %v297 = vmul.f32 %v138, %v295
    %v298 = vsel %vm162, %v297, 0.0
    %299 = vadd.xlane.f32.xlu0 %v298
    %v300 = vpop.xlane.xlu0 %299
    %vm301 = vcmask 60418
    %v302 = vsel %vm301, %v168, 0.0
    %303 = vadd.xlane.f32.xlu0 %v302
    %v304 = vpop.xlane.xlu0 %303
    %v306 = vrot.slane %v304, 2
    %v308 = vadd.f32 %v300, %v306
    %v310 = vrot.slane %v308, 6
    %v312 = vmul.f32 %v95, %v310
    %v314 = vrot.slane %v312, 2
    %v316 = vadd.f32 %v172, %v314
    %v317 = vrot.slane %v156, 4
    %v319 = vadd.f32 %v176, %v317
    %320 = vst [vmem:[#allocation1] sm:$0xff] %v87
    %s321 = scalar_lea.vmem [#allocation1], 4
    %v322 = vld [vmem:[%s321] ss:$9 sm:$0xff]
    %s323 = scalar_lea.vmem [#allocation1], 5
    %v324 = vld [vmem:[%s323] ss:$9 sm:$0xff]
    %v325 = vperm.slane %v322, 0
    %v326 = vperm.slane %v324, 0
    %v329 = vadd.f32 %v92, %v325
    %v330 = vadd.f32 %v92, %v326
    %v331 = vperm.slane %v263, 2
    %v332 = vlaneseq
    %v333 = vshrl.u32 %v332, 7
    %335 = vset.pattern.permute.xlu0 %v333
    %336 = vperm.xlu0 %335, %v331
    %v337 = vpop.permute.xlu0 %336
    %v338 = vperm.slane %v263, 3
    %v339 = vlaneseq
    %v340 = vshrl.u32 %v339, 7
    %342 = vset.pattern.permute.xlu0 %v340
    %343 = vperm.xlu0 %342, %v338
    %v344 = vpop.permute.xlu0 %343
    %v345 = vadd.f32 %v337, %v329
    %v346 = vadd.f32 %v344, %v330
    %v347 = vsel %vm113, %v345, -inf
    %v348 = vrot.slane %v347, 4
    %v349 = vmax.f32 %v347, %v348
    %v350 = vrot.slane %v349, 2
    %v351 = vmax.f32 %v349, %v350
    %v352 = vrot.slane %v351, 1
    %v353 = vmax.f32 %v351, %v352
    %v354 = vsel %vm113, %v346, -inf
    %v355 = vrot.slane %v354, 4
    %v356 = vmax.f32 %v354, %v355
    %v357 = vrot.slane %v356, 2
    %v358 = vmax.f32 %v356, %v357
    %v359 = vrot.slane %v358, 1
    %v360 = vmax.f32 %v358, %v359
    %vm361 = vcmp.ge.f32.partialorder %v345, %v353
    %vm362 = vcmp.ge.f32.partialorder %v346, %v360
    %v363 = vsel %vm361, %v220, 8
    %v364 = vsel %vm362, %v220, 8
    %v365 = vsel %vm113, %v363, 2147483647
    %v366 = vrot.slane %v365, 4
    %vm367 = vcmp.lt.s32.totalorder %v365, %v366
    %v368 = vsel %vm367, %v365, %v366
    %v369 = vrot.slane %v368, 2
    %vm370 = vcmp.lt.s32.totalorder %v368, %v369
    %v371 = vsel %vm370, %v368, %v369
    %v372 = vrot.slane %v371, 1
    %vm373 = vcmp.lt.s32.totalorder %v371, %v372
    %v374 = vsel %vm373, %v371, %v372
    %v375 = vsel %vm113, %v364, 2147483647
    %v376 = vrot.slane %v375, 4
    %vm377 = vcmp.lt.s32.totalorder %v375, %v376
    %v378 = vsel %vm377, %v375, %v376
    %v379 = vrot.slane %v378, 2
    %vm380 = vcmp.lt.s32.totalorder %v378, %v379
    %v381 = vsel %vm380, %v378, %v379
    %v382 = vrot.slane %v381, 1
    %vm383 = vcmp.lt.s32.totalorder %v381, %v382
    %v384 = vsel %vm383, %v381, %v382
    %v385 = vsel %vm245, %v384, %v374
    %s386 = scalar_lea.vmem %s8, 4
    %387 = vst.msk [vmem:[%s386] sm:$0x3] %vm162, %v385
    %vm390 = vcmask 1045509
    %v391 = vsel %vm390, %v360, %v353
    %v394 = vrot.slane %v263, 6
    %v396 = vsel %vm254, %v391, %v394
    %v397 = vperm.slane %v294, 2
    %v398 = vlaneseq
    %v399 = vshrl.u32 %v398, 7
    %401 = vset.pattern.permute.xlu0 %v399
    %402 = vperm.xlu0 %401, %v397
    %v403 = vpop.permute.xlu0 %402
    %v404 = vperm.slane %v294, 3
    %v405 = vlaneseq
    %v406 = vshrl.u32 %v405, 7
    %408 = vset.pattern.permute.xlu0 %v406
    %409 = vperm.xlu0 %408, %v404
    %v410 = vpop.permute.xlu0 %409
    %v411 = vadd.f32 %v403, %v329
    %v412 = vadd.f32 %v410, %v330
    %v413 = vsel %vm113, %v411, -inf
    %v414 = vrot.slane %v413, 4
    %v415 = vmax.f32 %v413, %v414
    %v416 = vrot.slane %v415, 2
    %v417 = vmax.f32 %v415, %v416
    %v418 = vrot.slane %v417, 1
    %v419 = vmax.f32 %v417, %v418
    %v420 = vsel %vm113, %v412, -inf
    %v421 = vrot.slane %v420, 4
    %v422 = vmax.f32 %v420, %v421
    %v423 = vrot.slane %v422, 2
    %v424 = vmax.f32 %v422, %v423
    %v425 = vrot.slane %v424, 1
    %v426 = vmax.f32 %v424, %v425
    %v427 = vsub.f32 %v411, %v419
    %v428 = vsub.f32 %v412, %v426
    %v429 = vmul.f32 %v427, 1.442695
    %v430 = vpow.pop %v429
    %v431 = vmul.f32 %v428, 1.442695
    %v432 = vpow.pop %v431
    %v433 = vsel %vm113, %v430, 0.0
    %v434 = vrot.slane %v433, 4
    %v435 = vadd.f32 %v433, %v434
    %v436 = vrot.slane %v435, 2
    %v437 = vadd.f32 %v435, %v436
    %v438 = vrot.slane %v437, 1
    %v439 = vadd.f32 %v437, %v438
    %v440 = vsel %vm113, %v432, 0.0
    %v441 = vrot.slane %v440, 4
    %v442 = vadd.f32 %v440, %v441
    %v443 = vrot.slane %v442, 2
    %v444 = vadd.f32 %v442, %v443
    %v445 = vrot.slane %v444, 1
    %v446 = vadd.f32 %v444, %v445
    %v447 = vlog2.pop %v439
    %v448 = vmul.f32 %v447, 0.6931472
    %v449 = vlog2.pop %v446
    %v450 = vmul.f32 %v449, 0.6931472
    %v451 = vadd.f32 %v448, %v419
    %v452 = vadd.f32 %v450, %v426
    %v455 = vsel %vm390, %v452, %v451
    %v458 = vrot.slane %v294, 6
    %v460 = vsel %vm254, %v455, %v458
    %v461 = vsel %vm301, %v297, 0.0
    %462 = vadd.xlane.f32.xlu0 %v461
    %v463 = vpop.xlane.xlu0 %462
    %vm464 = vcmask 62468
    %v465 = vsel %vm464, %v168, 0.0
    %466 = vadd.xlane.f32.xlu0 %v465
    %v467 = vpop.xlane.xlu0 %466
    %v469 = vrot.slane %v467, 2
    %v471 = vadd.f32 %v463, %v469
    %v473 = vrot.slane %v471, 6
    %v475 = vmul.f32 %v95, %v473
    %v477 = vrot.slane %v475, 4
    %v479 = vadd.f32 %v316, %v477
    %v480 = vsub.f32 1.0, %v96
    %482 = vset.pattern.permute.xlu0 0
    %483 = vperm.xlu0 %482, %v480
    %v484 = vpop.permute.xlu0 %483
    %v485 = vrot.slane %v484, 2
    %v487 = vmul.f32 %v148, %v485
    %v489 = vrot.slane %v487, 6
    %v491 = vadd.f32 %v319, %v489
    %492 = vst [vmem:[#allocation1] sm:$0xff] %v87
    %s493 = scalar_lea.vmem [#allocation1], 6
    %v494 = vld [vmem:[%s493] ss:$9 sm:$0xff]
    %s495 = scalar_lea.vmem [#allocation1], 7
    %v496 = vld [vmem:[%s495] ss:$9 sm:$0xff]
    %v497 = vperm.slane %v494, 0
    %v498 = vperm.slane %v496, 0
    %v501 = vadd.f32 %v92, %v497
    %v502 = vadd.f32 %v92, %v498
    %v503 = vperm.slane %v396, 4
    %v504 = vlaneseq
    %v505 = vshrl.u32 %v504, 7
    %507 = vset.pattern.permute.xlu0 %v505
    %508 = vperm.xlu0 %507, %v503
    %v509 = vpop.permute.xlu0 %508
    %v510 = vperm.slane %v396, 5
    %v511 = vlaneseq
    %v512 = vshrl.u32 %v511, 7
    %514 = vset.pattern.permute.xlu0 %v512
    %515 = vperm.xlu0 %514, %v510
    %v516 = vpop.permute.xlu0 %515
    %v517 = vadd.f32 %v509, %v501
    %v518 = vadd.f32 %v516, %v502
    %v519 = vsel %vm113, %v517, -inf
    %v520 = vrot.slane %v519, 4
    %v521 = vmax.f32 %v519, %v520
    %v522 = vrot.slane %v521, 2
    %v523 = vmax.f32 %v521, %v522
    %v524 = vrot.slane %v523, 1
    %v525 = vmax.f32 %v523, %v524
    %v526 = vsel %vm113, %v518, -inf
    %v527 = vrot.slane %v526, 4
    %v528 = vmax.f32 %v526, %v527
    %v529 = vrot.slane %v528, 2
    %v530 = vmax.f32 %v528, %v529
    %v531 = vrot.slane %v530, 1
    %v532 = vmax.f32 %v530, %v531
    %vm533 = vcmp.ge.f32.partialorder %v517, %v525
    %vm534 = vcmp.ge.f32.partialorder %v518, %v532
    %v535 = vsel %vm533, %v220, 8
    %v536 = vsel %vm534, %v220, 8
    %v537 = vsel %vm113, %v535, 2147483647
    %v538 = vrot.slane %v537, 4
    %vm539 = vcmp.lt.s32.totalorder %v537, %v538
    %v540 = vsel %vm539, %v537, %v538
    %v541 = vrot.slane %v540, 2
    %vm542 = vcmp.lt.s32.totalorder %v540, %v541
    %v543 = vsel %vm542, %v540, %v541
    %v544 = vrot.slane %v543, 1
    %vm545 = vcmp.lt.s32.totalorder %v543, %v544
    %v546 = vsel %vm545, %v543, %v544
    %v547 = vsel %vm113, %v536, 2147483647
    %v548 = vrot.slane %v547, 4
    %vm549 = vcmp.lt.s32.totalorder %v547, %v548
    %v550 = vsel %vm549, %v547, %v548
    %v551 = vrot.slane %v550, 2
    %vm552 = vcmp.lt.s32.totalorder %v550, %v551
    %v553 = vsel %vm552, %v550, %v551
    %v554 = vrot.slane %v553, 1
    %vm555 = vcmp.lt.s32.totalorder %v553, %v554
    %v556 = vsel %vm555, %v553, %v554
    %v557 = vsel %vm245, %v556, %v546
    %s558 = scalar_lea.vmem %s8, 6
    %559 = vst.msk [vmem:[%s558] sm:$0x3] %vm162, %v557
    %vm562 = vcmask 1047559
    %v563 = vsel %vm562, %v532, %v525
    %v566 = vrot.slane %v396, 6
    %v568 = vsel %vm254, %v563, %v566
    %v569 = vperm.slane %v460, 4
    %v570 = vlaneseq
    %v571 = vshrl.u32 %v570, 7
    %573 = vset.pattern.permute.xlu0 %v571
    %574 = vperm.xlu0 %573, %v569
    %v575 = vpop.permute.xlu0 %574
    %v576 = vperm.slane %v460, 5
    %v577 = vlaneseq
    %v578 = vshrl.u32 %v577, 7
    %580 = vset.pattern.permute.xlu0 %v578
    %581 = vperm.xlu0 %580, %v576
    %v582 = vpop.permute.xlu0 %581
    %v583 = vadd.f32 %v575, %v501
    %v584 = vadd.f32 %v582, %v502
    %v585 = vsel %vm113, %v583, -inf
    %v586 = vrot.slane %v585, 4
    %v587 = vmax.f32 %v585, %v586
    %v588 = vrot.slane %v587, 2
    %v589 = vmax.f32 %v587, %v588
    %v590 = vrot.slane %v589, 1
    %v591 = vmax.f32 %v589, %v590
    %v592 = vsel %vm113, %v584, -inf
    %v593 = vrot.slane %v592, 4
    %v594 = vmax.f32 %v592, %v593
    %v595 = vrot.slane %v594, 2
    %v596 = vmax.f32 %v594, %v595
    %v597 = vrot.slane %v596, 1
    %v598 = vmax.f32 %v596, %v597
    %v599 = vsub.f32 %v583, %v591
    %v600 = vsub.f32 %v584, %v598
    %v601 = vmul.f32 %v599, 1.442695
    %v602 = vpow.pop %v601
    %v603 = vmul.f32 %v600, 1.442695
    %v604 = vpow.pop %v603
    %v605 = vsel %vm113, %v602, 0.0
    %v606 = vrot.slane %v605, 4
    %v607 = vadd.f32 %v605, %v606
    %v608 = vrot.slane %v607, 2
    %v609 = vadd.f32 %v607, %v608
    %v610 = vrot.slane %v609, 1
    %v611 = vadd.f32 %v609, %v610
    %v612 = vsel %vm113, %v604, 0.0
    %v613 = vrot.slane %v612, 4
    %v614 = vadd.f32 %v612, %v613
    %v615 = vrot.slane %v614, 2
    %v616 = vadd.f32 %v614, %v615
    %v617 = vrot.slane %v616, 1
    %v618 = vadd.f32 %v616, %v617
    %v619 = vlog2.pop %v611
    %v620 = vmul.f32 %v619, 0.6931472
    %v621 = vlog2.pop %v618
    %v622 = vmul.f32 %v621, 0.6931472
    %v623 = vadd.f32 %v620, %v591
    %v624 = vadd.f32 %v622, %v598
    %v627 = vsel %vm562, %v624, %v623
    %v630 = vrot.slane %v460, 6
    %v632 = vsel %vm254, %v627, %v630
    %v633 = vsel %vm464, %v297, 0.0
    %634 = vadd.xlane.f32.xlu0 %v633
    %v635 = vpop.xlane.xlu0 %634
    %vm636 = vcmask 64518
    %v637 = vsel %vm636, %v168, 0.0
    %638 = vadd.xlane.f32.xlu0 %v637
    %v639 = vpop.xlane.xlu0 %638
    %v641 = vrot.slane %v639, 2
    %v643 = vadd.f32 %v635, %v641
    %v645 = vrot.slane %v643, 6
    %v647 = vmul.f32 %v95, %v645
    %v649 = vrot.slane %v647, 6
    %v651 = vadd.f32 %v479, %v649
    %653 = vset.pattern.permute.xlu0 0
    %654 = vperm.xlu0 %653, %v96
    %v655 = vpop.permute.xlu0 %654
    %v657 = vmul.f32 %v112, %v655
    %v658 = vmul.f32 %v657, %v485
    %v659 = vadd.f32 %v491, %v658
    %v661 = vrot.slane %v90, 1
    %v662 = vperm.slane %v90, 0
    %v663 = vperm.slane %v661, 0
    %v666 = vadd.f32 %v92, %v662
    %v667 = vadd.f32 %v92, %v663
    %v668 = vperm.slane %v568, 6
    %v669 = vlaneseq
    %v670 = vshrl.u32 %v669, 7
    %672 = vset.pattern.permute.xlu0 %v670
    %673 = vperm.xlu0 %672, %v668
    %v674 = vpop.permute.xlu0 %673
    %v675 = vperm.slane %v568, 7
    %v676 = vlaneseq
    %v677 = vshrl.u32 %v676, 7
    %679 = vset.pattern.permute.xlu0 %v677
    %680 = vperm.xlu0 %679, %v675
    %v681 = vpop.permute.xlu0 %680
    %v682 = vadd.f32 %v674, %v666
    %v683 = vadd.f32 %v681, %v667
    %v684 = vsel %vm113, %v682, -inf
    %v685 = vrot.slane %v684, 4
    %v686 = vmax.f32 %v684, %v685
    %v687 = vrot.slane %v686, 2
    %v688 = vmax.f32 %v686, %v687
    %v689 = vrot.slane %v688, 1
    %v690 = vmax.f32 %v688, %v689
    %v691 = vsel %vm113, %v683, -inf
    %v692 = vrot.slane %v691, 4
    %v693 = vmax.f32 %v691, %v692
    %v694 = vrot.slane %v693, 2
    %v695 = vmax.f32 %v693, %v694
    %v696 = vrot.slane %v695, 1
    %v697 = vmax.f32 %v695, %v696
    %vm698 = vcmp.ge.f32.partialorder %v682, %v690
    %vm699 = vcmp.ge.f32.partialorder %v683, %v697
    %v700 = vsel %vm698, %v220, 8
    %v701 = vsel %vm699, %v220, 8
    %v702 = vsel %vm113, %v700, 2147483647
    %v703 = vrot.slane %v702, 4
    %vm704 = vcmp.lt.s32.totalorder %v702, %v703
    %v705 = vsel %vm704, %v702, %v703
    %v706 = vrot.slane %v705, 2
    %vm707 = vcmp.lt.s32.totalorder %v705, %v706
    %v708 = vsel %vm707, %v705, %v706
    %v709 = vrot.slane %v708, 1
    %vm710 = vcmp.lt.s32.totalorder %v708, %v709
    %v711 = vsel %vm710, %v708, %v709
    %v712 = vsel %vm113, %v701, 2147483647
    %v713 = vrot.slane %v712, 4
    %vm714 = vcmp.lt.s32.totalorder %v712, %v713
    %v715 = vsel %vm714, %v712, %v713
    %v716 = vrot.slane %v715, 2
    %vm717 = vcmp.lt.s32.totalorder %v715, %v716
    %v718 = vsel %vm717, %v715, %v716
    %v719 = vrot.slane %v718, 1
    %vm720 = vcmp.lt.s32.totalorder %v718, %v719
    %v721 = vsel %vm720, %v718, %v719
    %v722 = vsel %vm245, %v721, %v711
    %s723 = scalar_lea.vmem %s8, 8
    %724 = vst.msk [vmem:[%s723] sm:$0x3] %vm162, %v722
    %vm725 = vcmp.gt.f32.partialorder %v96, 0.0
    %v726 = vsel %vm725, 1, 0
    %727 = vset.pattern.permute.xlu0 0
    %728 = vperm.xlu0 %727, %v726
    %v729 = vpop.permute.xlu0 %728
    %vm730 = vcmp.eq.s32.totalorder %v729, 1
    %v733 = vsel %vm245, %v697, %v690
    %v736 = vrot.slane %v568, 6
    %v738 = vsel %vm730, %v733, %v736
    %v739 = vperm.slane %v632, 6
    %v740 = vlaneseq
    %v741 = vshrl.u32 %v740, 7
    %743 = vset.pattern.permute.xlu0 %v741
    %744 = vperm.xlu0 %743, %v739
    %v745 = vpop.permute.xlu0 %744
    %v746 = vperm.slane %v632, 7
    %v747 = vlaneseq
    %v748 = vshrl.u32 %v747, 7
    %750 = vset.pattern.permute.xlu0 %v748
    %751 = vperm.xlu0 %750, %v746
    %v752 = vpop.permute.xlu0 %751
    %v753 = vadd.f32 %v745, %v666
    %v754 = vadd.f32 %v752, %v667
    %v755 = vsel %vm113, %v753, -inf
    %v756 = vrot.slane %v755, 4
    %v757 = vmax.f32 %v755, %v756
    %v758 = vrot.slane %v757, 2
    %v759 = vmax.f32 %v757, %v758
    %v760 = vrot.slane %v759, 1
    %v761 = vmax.f32 %v759, %v760
    %v762 = vsel %vm113, %v754, -inf
    %v763 = vrot.slane %v762, 4
    %v764 = vmax.f32 %v762, %v763
    %v765 = vrot.slane %v764, 2
    %v766 = vmax.f32 %v764, %v765
    %v767 = vrot.slane %v766, 1
    %v768 = vmax.f32 %v766, %v767
    %v769 = vsub.f32 %v753, %v761
    %v770 = vsub.f32 %v754, %v768
    %v771 = vmul.f32 %v769, 1.442695
    %v772 = vpow.pop %v771
    %v773 = vmul.f32 %v770, 1.442695
    %v774 = vpow.pop %v773
    %v775 = vsel %vm113, %v772, 0.0
    %v776 = vrot.slane %v775, 4
    %v777 = vadd.f32 %v775, %v776
    %v778 = vrot.slane %v777, 2
    %v779 = vadd.f32 %v777, %v778
    %v780 = vrot.slane %v779, 1
    %v781 = vadd.f32 %v779, %v780
    %v782 = vsel %vm113, %v774, 0.0
    %v783 = vrot.slane %v782, 4
    %v784 = vadd.f32 %v782, %v783
    %v785 = vrot.slane %v784, 2
    %v786 = vadd.f32 %v784, %v785
    %v787 = vrot.slane %v786, 1
    %v788 = vadd.f32 %v786, %v787
    %v789 = vlog2.pop %v781
    %v790 = vmul.f32 %v789, 0.6931472
    %v791 = vlog2.pop %v788
    %v792 = vmul.f32 %v791, 0.6931472
    %v793 = vadd.f32 %v790, %v761
    %v794 = vadd.f32 %v792, %v768
    %v797 = vsel %vm245, %v794, %v793
    %v800 = vrot.slane %v632, 6
    %v802 = vsel %vm730, %v797, %v800
    %v803 = vrot.slane %v112, 2
    %v805 = vmul.f32 %v138, %v803
    %v806 = vsel %vm636, %v805, 0.0
    %807 = vadd.xlane.f32.xlu0 %v806
    %v808 = vpop.xlane.xlu0 %807
    %v809 = vmul.f32 %v112, %v90
    %v810 = vsel %vm162, %v809, 0.0
    %811 = vadd.xlane.f32.xlu0 %v810
    %v812 = vpop.xlane.xlu0 %811
    %v814 = vrot.slane %v812, 2
    %v816 = vadd.f32 %v808, %v814
    %v818 = vrot.slane %v816, 6
    %v820 = vmul.f32 %v96, %v818
    %v821 = vadd.f32 %v651, %v820
    %v823 = vrot.slane %v658, 2
    %v825 = vadd.f32 %v659, %v823
    %826 = vst [vmem:[#allocation1] sm:$0xff] %v90
    %s827 = scalar_lea.vmem [#allocation1], 2
    %v828 = vld [vmem:[%s827] ss:$9 sm:$0xff]
    %s829 = scalar_lea.vmem [#allocation1], 3
    %v830 = vld [vmem:[%s829] ss:$9 sm:$0xff]
    %v831 = vperm.slane %v828, 0
    %v832 = vperm.slane %v830, 0
    %v835 = vadd.f32 %v92, %v831
    %v836 = vadd.f32 %v92, %v832
    %v837 = vperm.slane %v738, 0
    %v838 = vlaneseq
    %v839 = vshrl.u32 %v838, 7
    %841 = vset.pattern.permute.xlu0 %v839
    %842 = vperm.xlu0 %841, %v837
    %v843 = vpop.permute.xlu0 %842
    %v844 = vperm.slane %v738, 1
    %v845 = vlaneseq
    %v846 = vshrl.u32 %v845, 7
    %848 = vset.pattern.permute.xlu0 %v846
    %849 = vperm.xlu0 %848, %v844
    %v850 = vpop.permute.xlu0 %849
    %v851 = vadd.f32 %v843, %v835
    %v852 = vadd.f32 %v850, %v836
    %v853 = vsel %vm113, %v851, -inf
    %v854 = vrot.slane %v853, 4
    %v855 = vmax.f32 %v853, %v854
    %v856 = vrot.slane %v855, 2
    %v857 = vmax.f32 %v855, %v856
    %v858 = vrot.slane %v857, 1
    %v859 = vmax.f32 %v857, %v858
    %v860 = vsel %vm113, %v852, -inf
    %v861 = vrot.slane %v860, 4
    %v862 = vmax.f32 %v860, %v861
    %v863 = vrot.slane %v862, 2
    %v864 = vmax.f32 %v862, %v863
    %v865 = vrot.slane %v864, 1
    %v866 = vmax.f32 %v864, %v865
    %vm867 = vcmp.ge.f32.partialorder %v851, %v859
    %vm868 = vcmp.ge.f32.partialorder %v852, %v866
    %v869 = vsel %vm867, %v220, 8
    %v870 = vsel %vm868, %v220, 8
    %v871 = vsel %vm113, %v869, 2147483647
    %v872 = vrot.slane %v871, 4
    %vm873 = vcmp.lt.s32.totalorder %v871, %v872
    %v874 = vsel %vm873, %v871, %v872
    %v875 = vrot.slane %v874, 2
    %vm876 = vcmp.lt.s32.totalorder %v874, %v875
    %v877 = vsel %vm876, %v874, %v875
    %v878 = vrot.slane %v877, 1
    %vm879 = vcmp.lt.s32.totalorder %v877, %v878
    %v880 = vsel %vm879, %v877, %v878
    %v881 = vsel %vm113, %v870, 2147483647
    %v882 = vrot.slane %v881, 4
    %vm883 = vcmp.lt.s32.totalorder %v881, %v882
    %v884 = vsel %vm883, %v881, %v882
    %v885 = vrot.slane %v884, 2
    %vm886 = vcmp.lt.s32.totalorder %v884, %v885
    %v887 = vsel %vm886, %v884, %v885
    %v888 = vrot.slane %v887, 1
    %vm889 = vcmp.lt.s32.totalorder %v887, %v888
    %v890 = vsel %vm889, %v887, %v888
    %v891 = vsel %vm245, %v890, %v880
    %s892 = scalar_lea.vmem %s8, 10
    %893 = vst.msk [vmem:[%s892] sm:$0x3] %vm162, %v891
    %v896 = vsel %vm257, %v866, %v859
    %v899 = vrot.slane %v738, 6
    %v901 = vsel %vm730, %v896, %v899
    %v902 = vperm.slane %v802, 0
    %v903 = vlaneseq
    %v904 = vshrl.u32 %v903, 7
    %906 = vset.pattern.permute.xlu0 %v904
    %907 = vperm.xlu0 %906, %v902
    %v908 = vpop.permute.xlu0 %907
    %v909 = vperm.slane %v802, 1
    %v910 = vlaneseq
    %v911 = vshrl.u32 %v910, 7
    %913 = vset.pattern.permute.xlu0 %v911
    %914 = vperm.xlu0 %913, %v909
    %v915 = vpop.permute.xlu0 %914
    %v916 = vadd.f32 %v908, %v835
    %v917 = vadd.f32 %v915, %v836
    %v918 = vsel %vm113, %v916, -inf
    %v919 = vrot.slane %v918, 4
    %v920 = vmax.f32 %v918, %v919
    %v921 = vrot.slane %v920, 2
    %v922 = vmax.f32 %v920, %v921
    %v923 = vrot.slane %v922, 1
    %v924 = vmax.f32 %v922, %v923
    %v925 = vsel %vm113, %v917, -inf
    %v926 = vrot.slane %v925, 4
    %v927 = vmax.f32 %v925, %v926
    %v928 = vrot.slane %v927, 2
    %v929 = vmax.f32 %v927, %v928
    %v930 = vrot.slane %v929, 1
    %v931 = vmax.f32 %v929, %v930
    %v932 = vsub.f32 %v916, %v924
    %v933 = vsub.f32 %v917, %v931
    %v934 = vmul.f32 %v932, 1.442695
    %v935 = vpow.pop %v934
    %v936 = vmul.f32 %v933, 1.442695
    %v937 = vpow.pop %v936
    %v938 = vsel %vm113, %v935, 0.0
    %v939 = vrot.slane %v938, 4
    %v940 = vadd.f32 %v938, %v939
    %v941 = vrot.slane %v940, 2
    %v942 = vadd.f32 %v940, %v941
    %v943 = vrot.slane %v942, 1
    %v944 = vadd.f32 %v942, %v943
    %v945 = vsel %vm113, %v937, 0.0
    %v946 = vrot.slane %v945, 4
    %v947 = vadd.f32 %v945, %v946
    %v948 = vrot.slane %v947, 2
    %v949 = vadd.f32 %v947, %v948
    %v950 = vrot.slane %v949, 1
    %v951 = vadd.f32 %v949, %v950
    %v952 = vlog2.pop %v944
    %v953 = vmul.f32 %v952, 0.6931472
    %v954 = vlog2.pop %v951
    %v955 = vmul.f32 %v954, 0.6931472
    %v956 = vadd.f32 %v953, %v924
    %v957 = vadd.f32 %v955, %v931
    %v960 = vsel %vm257, %v957, %v956
    %v963 = vrot.slane %v802, 6
    %v965 = vsel %vm730, %v960, %v963
    %v966 = vmul.f32 %v141, %v803
    %v967 = vsel %vm162, %v966, 0.0
    %968 = vadd.xlane.f32.xlu0 %v967
    %v969 = vpop.xlane.xlu0 %968
    %v970 = vsel %vm301, %v809, 0.0
    %971 = vadd.xlane.f32.xlu0 %v970
    %v972 = vpop.xlane.xlu0 %971
    %v974 = vrot.slane %v972, 2
    %v976 = vadd.f32 %v969, %v974
    %v978 = vrot.slane %v976, 6
    %v980 = vmul.f32 %v96, %v978
    %v982 = vrot.slane %v980, 2
    %v984 = vadd.f32 %v821, %v982
    %v985 = vrot.slane %v658, 4
    %v987 = vadd.f32 %v825, %v985
    %988 = vst [vmem:[#allocation1] sm:$0xff] %v90
    %s989 = scalar_lea.vmem [#allocation1], 4
    %v990 = vld [vmem:[%s989] ss:$9 sm:$0xff]
    %s991 = scalar_lea.vmem [#allocation1], 5
    %v992 = vld [vmem:[%s991] ss:$9 sm:$0xff]
    %v993 = vperm.slane %v990, 0
    %v994 = vperm.slane %v992, 0
    %v997 = vadd.f32 %v92, %v993
    %v998 = vadd.f32 %v92, %v994
    %v999 = vperm.slane %v901, 2
    %v1000 = vlaneseq
    %v1001 = vshrl.u32 %v1000, 7
    %1003 = vset.pattern.permute.xlu0 %v1001
    %1004 = vperm.xlu0 %1003, %v999
    %v1005 = vpop.permute.xlu0 %1004
    %v1006 = vperm.slane %v901, 3
    %v1007 = vlaneseq
    %v1008 = vshrl.u32 %v1007, 7
    %1010 = vset.pattern.permute.xlu0 %v1008
    %1011 = vperm.xlu0 %1010, %v1006
    %v1012 = vpop.permute.xlu0 %1011
    %v1013 = vadd.f32 %v1005, %v997
    %v1014 = vadd.f32 %v1012, %v998
    %v1015 = vsel %vm113, %v1013, -inf
    %v1016 = vrot.slane %v1015, 4
    %v1017 = vmax.f32 %v1015, %v1016
    %v1018 = vrot.slane %v1017, 2
    %v1019 = vmax.f32 %v1017, %v1018
    %v1020 = vrot.slane %v1019, 1
    %v1021 = vmax.f32 %v1019, %v1020
    %v1022 = vsel %vm113, %v1014, -inf
    %v1023 = vrot.slane %v1022, 4
    %v1024 = vmax.f32 %v1022, %v1023
    %v1025 = vrot.slane %v1024, 2
    %v1026 = vmax.f32 %v1024, %v1025
    %v1027 = vrot.slane %v1026, 1
    %v1028 = vmax.f32 %v1026, %v1027
    %vm1029 = vcmp.ge.f32.partialorder %v1013, %v1021
    %vm1030 = vcmp.ge.f32.partialorder %v1014, %v1028
    %v1031 = vsel %vm1029, %v220, 8
    %v1032 = vsel %vm1030, %v220, 8
    %v1033 = vsel %vm113, %v1031, 2147483647
    %v1034 = vrot.slane %v1033, 4
    %vm1035 = vcmp.lt.s32.totalorder %v1033, %v1034
    %v1036 = vsel %vm1035, %v1033, %v1034
    %v1037 = vrot.slane %v1036, 2
    %vm1038 = vcmp.lt.s32.totalorder %v1036, %v1037
    %v1039 = vsel %vm1038, %v1036, %v1037
    %v1040 = vrot.slane %v1039, 1
    %vm1041 = vcmp.lt.s32.totalorder %v1039, %v1040
    %v1042 = vsel %vm1041, %v1039, %v1040
    %v1043 = vsel %vm113, %v1032, 2147483647
    %v1044 = vrot.slane %v1043, 4
    %vm1045 = vcmp.lt.s32.totalorder %v1043, %v1044
    %v1046 = vsel %vm1045, %v1043, %v1044
    %v1047 = vrot.slane %v1046, 2
    %vm1048 = vcmp.lt.s32.totalorder %v1046, %v1047
    %v1049 = vsel %vm1048, %v1046, %v1047
    %v1050 = vrot.slane %v1049, 1
    %vm1051 = vcmp.lt.s32.totalorder %v1049, %v1050
    %v1052 = vsel %vm1051, %v1049, %v1050
    %v1053 = vsel %vm245, %v1052, %v1042
    %s1054 = scalar_lea.vmem %s8, 12
    %1055 = vst.msk [vmem:[%s1054] sm:$0x3] %vm162, %v1053
    %v1058 = vsel %vm390, %v1028, %v1021
    %v1061 = vrot.slane %v901, 6
    %v1063 = vsel %vm730, %v1058, %v1061
    %v1064 = vperm.slane %v965, 2
    %v1065 = vlaneseq
    %v1066 = vshrl.u32 %v1065, 7
    %1068 = vset.pattern.permute.xlu0 %v1066
    %1069 = vperm.xlu0 %1068, %v1064
    %v1070 = vpop.permute.xlu0 %1069
    %v1071 = vperm.slane %v965, 3
    %v1072 = vlaneseq
    %v1073 = vshrl.u32 %v1072, 7
    %1075 = vset.pattern.permute.xlu0 %v1073
    %1076 = vperm.xlu0 %1075, %v1071
    %v1077 = vpop.permute.xlu0 %1076
    %v1078 = vadd.f32 %v1070, %v997
    %v1079 = vadd.f32 %v1077, %v998
    %v1080 = vsel %vm113, %v1078, -inf
    %v1081 = vrot.slane %v1080, 4
    %v1082 = vmax.f32 %v1080, %v1081
    %v1083 = vrot.slane %v1082, 2
    %v1084 = vmax.f32 %v1082, %v1083
    %v1085 = vrot.slane %v1084, 1
    %v1086 = vmax.f32 %v1084, %v1085
    %v1087 = vsel %vm113, %v1079, -inf
    %v1088 = vrot.slane %v1087, 4
    %v1089 = vmax.f32 %v1087, %v1088
    %v1090 = vrot.slane %v1089, 2
    %v1091 = vmax.f32 %v1089, %v1090
    %v1092 = vrot.slane %v1091, 1
    %v1093 = vmax.f32 %v1091, %v1092
    %v1094 = vsub.f32 %v1078, %v1086
    %v1095 = vsub.f32 %v1079, %v1093
    %v1096 = vmul.f32 %v1094, 1.442695
    %v1097 = vpow.pop %v1096
    %v1098 = vmul.f32 %v1095, 1.442695
    %v1099 = vpow.pop %v1098
    %v1100 = vsel %vm113, %v1097, 0.0
    %v1101 = vrot.slane %v1100, 4
    %v1102 = vadd.f32 %v1100, %v1101
    %v1103 = vrot.slane %v1102, 2
    %v1104 = vadd.f32 %v1102, %v1103
    %v1105 = vrot.slane %v1104, 1
    %v1106 = vadd.f32 %v1104, %v1105
    %v1107 = vsel %vm113, %v1099, 0.0
    %v1108 = vrot.slane %v1107, 4
    %v1109 = vadd.f32 %v1107, %v1108
    %v1110 = vrot.slane %v1109, 2
    %v1111 = vadd.f32 %v1109, %v1110
    %v1112 = vrot.slane %v1111, 1
    %v1113 = vadd.f32 %v1111, %v1112
    %v1114 = vlog2.pop %v1106
    %v1115 = vmul.f32 %v1114, 0.6931472
    %v1116 = vlog2.pop %v1113
    %v1117 = vmul.f32 %v1116, 0.6931472
    %v1118 = vadd.f32 %v1115, %v1086
    %v1119 = vadd.f32 %v1117, %v1093
    %v1122 = vsel %vm390, %v1119, %v1118
    %v1125 = vrot.slane %v965, 6
    %v1127 = vsel %vm730, %v1122, %v1125
    %v1128 = vsel %vm301, %v966, 0.0
    %1129 = vadd.xlane.f32.xlu0 %v1128
    %v1130 = vpop.xlane.xlu0 %1129
    %v1131 = vsel %vm464, %v809, 0.0
    %1132 = vadd.xlane.f32.xlu0 %v1131
    %v1133 = vpop.xlane.xlu0 %1132
    %v1135 = vrot.slane %v1133, 2
    %v1137 = vadd.f32 %v1130, %v1135
    %v1139 = vrot.slane %v1137, 6
    %v1141 = vmul.f32 %v96, %v1139
    %v1143 = vrot.slane %v1141, 4
    %v1145 = vadd.f32 %v984, %v1143
    %v1147 = vrot.slane %v657, 6
    %v1149 = vadd.f32 %v987, %v1147
    %1150 = vst [vmem:[#allocation1] sm:$0xff] %v90
    %s1151 = scalar_lea.vmem [#allocation1], 6
    %v1152 = vld [vmem:[%s1151] ss:$9 sm:$0xff]
    %s1153 = scalar_lea.vmem [#allocation1], 7
    %v1154 = vld [vmem:[%s1153] ss:$9 sm:$0xff]
    %v1155 = vperm.slane %v1152, 0
    %v1156 = vperm.slane %v1154, 0
    %v1159 = vadd.f32 %v92, %v1155
    %v1160 = vadd.f32 %v92, %v1156
    %v1161 = vperm.slane %v1063, 4
    %v1162 = vlaneseq
    %v1163 = vshrl.u32 %v1162, 7
    %1165 = vset.pattern.permute.xlu0 %v1163
    %1166 = vperm.xlu0 %1165, %v1161
    %v1167 = vpop.permute.xlu0 %1166
    %v1168 = vperm.slane %v1063, 5
    %v1169 = vlaneseq
    %v1170 = vshrl.u32 %v1169, 7
    %1172 = vset.pattern.permute.xlu0 %v1170
    %1173 = vperm.xlu0 %1172, %v1168
    %v1174 = vpop.permute.xlu0 %1173
    %v1175 = vadd.f32 %v1167, %v1159
    %v1176 = vadd.f32 %v1174, %v1160
    %v1177 = vsel %vm113, %v1175, -inf
    %v1178 = vrot.slane %v1177, 4
    %v1179 = vmax.f32 %v1177, %v1178
    %v1180 = vrot.slane %v1179, 2
    %v1181 = vmax.f32 %v1179, %v1180
    %v1182 = vrot.slane %v1181, 1
    %v1183 = vmax.f32 %v1181, %v1182
    %v1184 = vsel %vm113, %v1176, -inf
    %v1185 = vrot.slane %v1184, 4
    %v1186 = vmax.f32 %v1184, %v1185
    %v1187 = vrot.slane %v1186, 2
    %v1188 = vmax.f32 %v1186, %v1187
    %v1189 = vrot.slane %v1188, 1
    %v1190 = vmax.f32 %v1188, %v1189
    %vm1191 = vcmp.ge.f32.partialorder %v1175, %v1183
    %vm1192 = vcmp.ge.f32.partialorder %v1176, %v1190
    %v1193 = vsel %vm1191, %v220, 8
    %v1194 = vsel %vm1192, %v220, 8
    %v1195 = vsel %vm113, %v1193, 2147483647
    %v1196 = vrot.slane %v1195, 4
    %vm1197 = vcmp.lt.s32.totalorder %v1195, %v1196
    %v1198 = vsel %vm1197, %v1195, %v1196
    %v1199 = vrot.slane %v1198, 2
    %vm1200 = vcmp.lt.s32.totalorder %v1198, %v1199
    %v1201 = vsel %vm1200, %v1198, %v1199
    %v1202 = vrot.slane %v1201, 1
    %vm1203 = vcmp.lt.s32.totalorder %v1201, %v1202
    %v1204 = vsel %vm1203, %v1201, %v1202
    %v1205 = vsel %vm113, %v1194, 2147483647
    %v1206 = vrot.slane %v1205, 4
    %vm1207 = vcmp.lt.s32.totalorder %v1205, %v1206
    %v1208 = vsel %vm1207, %v1205, %v1206
    %v1209 = vrot.slane %v1208, 2
    %vm1210 = vcmp.lt.s32.totalorder %v1208, %v1209
    %v1211 = vsel %vm1210, %v1208, %v1209
    %v1212 = vrot.slane %v1211, 1
    %vm1213 = vcmp.lt.s32.totalorder %v1211, %v1212
    %v1214 = vsel %vm1213, %v1211, %v1212
    %v1215 = vsel %vm245, %v1214, %v1204
    %s1216 = scalar_lea.vmem %s8, 14
    %1217 = vst.msk [vmem:[%s1216] sm:$0x3] %vm162, %v1215
    %v1220 = vsel %vm562, %v1190, %v1183
    %v1223 = vrot.slane %v1063, 6
    %v1225 = vsel %vm730, %v1220, %v1223
    %v1226 = vperm.slane %v1127, 4
    %v1227 = vlaneseq
    %v1228 = vshrl.u32 %v1227, 7
    %1230 = vset.pattern.permute.xlu0 %v1228
    %1231 = vperm.xlu0 %1230, %v1226
    %v1232 = vpop.permute.xlu0 %1231
    %v1233 = vperm.slane %v1127, 5
    %v1234 = vlaneseq
    %v1235 = vshrl.u32 %v1234, 7
    %1237 = vset.pattern.permute.xlu0 %v1235
    %1238 = vperm.xlu0 %1237, %v1233
    %v1239 = vpop.permute.xlu0 %1238
    %v1240 = vadd.f32 %v1232, %v1159
    %v1241 = vadd.f32 %v1239, %v1160
    %v1242 = vsel %vm113, %v1240, -inf
    %v1243 = vrot.slane %v1242, 4
    %v1244 = vmax.f32 %v1242, %v1243
    %v1245 = vrot.slane %v1244, 2
    %v1246 = vmax.f32 %v1244, %v1245
    %v1247 = vrot.slane %v1246, 1
    %v1248 = vmax.f32 %v1246, %v1247
    %v1249 = vsel %vm113, %v1241, -inf
    %v1250 = vrot.slane %v1249, 4
    %v1251 = vmax.f32 %v1249, %v1250
    %v1252 = vrot.slane %v1251, 2
    %v1253 = vmax.f32 %v1251, %v1252
    %v1254 = vrot.slane %v1253, 1
    %v1255 = vmax.f32 %v1253, %v1254
    %v1256 = vsub.f32 %v1240, %v1248
    %v1257 = vsub.f32 %v1241, %v1255
    %v1258 = vmul.f32 %v1256, 1.442695
    %v1259 = vpow.pop %v1258
    %v1260 = vmul.f32 %v1257, 1.442695
    %v1261 = vpow.pop %v1260
    %v1262 = vsel %vm113, %v1259, 0.0
    %v1263 = vrot.slane %v1262, 4
    %v1264 = vadd.f32 %v1262, %v1263
    %v1265 = vrot.slane %v1264, 2
    %v1266 = vadd.f32 %v1264, %v1265
    %v1267 = vrot.slane %v1266, 1
    %v1268 = vadd.f32 %v1266, %v1267
    %v1269 = vsel %vm113, %v1261, 0.0
    %v1270 = vrot.slane %v1269, 4
    %v1271 = vadd.f32 %v1269, %v1270
    %v1272 = vrot.slane %v1271, 2
    %v1273 = vadd.f32 %v1271, %v1272
    %v1274 = vrot.slane %v1273, 1
    %v1275 = vadd.f32 %v1273, %v1274
    %v1276 = vlog2.pop %v1268
    %v1277 = vmul.f32 %v1276, 0.6931472
    %v1278 = vlog2.pop %v1275
    %v1279 = vmul.f32 %v1278, 0.6931472
    %v1280 = vadd.f32 %v1277, %v1248
    %v1281 = vadd.f32 %v1279, %v1255
    %v1284 = vsel %vm562, %v1281, %v1280
    %v1287 = vrot.slane %v1127, 6
    %v1289 = vsel %vm730, %v1284, %v1287
    %v1290 = vsel %vm464, %v966, 0.0
    %1291 = vadd.xlane.f32.xlu0 %v1290
    %v1292 = vpop.xlane.xlu0 %1291
    %v1293 = vsel %vm636, %v809, 0.0
    %1294 = vadd.xlane.f32.xlu0 %v1293
    %v1295 = vpop.xlane.xlu0 %1294
    %v1297 = vrot.slane %v1295, 2
    %v1299 = vadd.f32 %v1292, %v1297
    %v1301 = vrot.slane %v1299, 6
    %v1303 = vmul.f32 %v96, %v1301
    %v1305 = vrot.slane %v1303, 6
    %v1307 = vadd.f32 %v1145, %v1305
    %v1309 = vperm.slane %v94, 0
    %v1311 = vadd.f32 %v1225, %v1309
    %1312 = vst.msk [vmem:[%s9 - $0x6] sm:$0xc0] %vm636, %v1311
    %v1313 = vadd.f32 %v1289, %v1309
    %v1314 = vsel %vm636, %v1313, -inf
    %1315 = vmax.xlane.f32.xlu0 %v1314
    %v1316 = vpop.xlane.xlu0 %1315
    %v1317 = vsub.f32 %v1313, %v1316
    %v1318 = vmul.f32 %v1317, 1.442695
    %v1319 = vpow.pop %v1318
    %v1320 = vsel %vm636, %v1319, 0.0
    %1321 = vadd.xlane.f32.xlu0 %v1320
    %v1322 = vpop.xlane.xlu0 %1321
    %v1323 = vlog2.pop %v1322
    %v1324 = vmul.f32 %v1323, 0.6931472
    %v1325 = vadd.f32 %v1324, %v1316
    %v1326 = vmul.f32 %v1149, %v1309
    %v1327 = vsel %vm162, %v1326, 0.0
    %1328 = vadd.xlane.f32.xlu0 %v1327
    %v1329 = vpop.xlane.xlu0 %1328
    %v1330 = vadd.f32 %v1307, %v1329
    %v1332 = vrot.slane %v1330, 2
    %v1334 = vsub.f32 %v1325, %v1332
    %vm1335 = vcmask 7174
    %1336 = vst.msk [vmem:[%s10 - $0x6] sm:$0xc0] %vm1335, %v1334
    // Predicated region
    $region38: #{_lambda_.1} parent=1 // pred_check
      _
    $region39: #{_lambda_.1} parent=1 // pred_check_branch
      %1338 = sbr.rel (0) target = $region41
    $region40: #{_lambda_.1} parent=1 // pred_region
      _
    $region41: #{_lambda_.1} parent=1 // pred_fallthru
      _
    // Predicated region
    $region42: #{_lambda_.1} parent=1 // pred_check
      _
    $region43: #{_lambda_.1} parent=1 // pred_check_branch
      %1340 = sbr.rel (0) target = $region45
    $region44: #{_lambda_.1} parent=1 // pred_region
      _
    $region45: #{_lambda_.1} parent=1 // pred_fallthru
      _
    // Predicated region
    $region46: #{_lambda_.1} parent=1 // pred_check
      _
    $region47: #{_lambda_.1} parent=1 // pred_check_branch
      %1342 = sbr.rel (0) target = $region49
    $region48: #{_lambda_.1} parent=1 // pred_region
      _
    $region49: #{_lambda_.1} parent=1 // pred_fallthru
      _
    // Predicated region
    $region50: #{_lambda_.1} parent=1 // pred_check
      _
    $region51: #{_lambda_.1} parent=1 // pred_check_branch
      %1344 = sbr.rel (0) target = $region53
    $region52: #{_lambda_.1} parent=1 // pred_region
      _
    $region53: #{_lambda_.1} parent=1 // pred_fallthru
      _
    // Predicated region
    $region54: #{_lambda_.1} parent=1 // pred_check
      _
    $region55: #{_lambda_.1} parent=1 // pred_check_branch
      %1346 = sbr.rel (0) target = $region57
    $region56: #{_lambda_.1} parent=1 // pred_region
      _
    $region57: #{_lambda_.1} parent=1 // pred_fallthru
      _
    // Predicated region
    $region58: #{_lambda_.1} parent=1 // pred_check
      _
    $region59: #{_lambda_.1} parent=1 // pred_check_branch
      %1348 = sbr.rel (0) target = $region61
    $region60: #{_lambda_.1} parent=1 // pred_region
      _
    $region61: #{_lambda_.1} parent=1 // pred_fallthru
      _
    %1349 = vsyncpa [#allocation3], 1

</llo_original>
